<compile_context>
chip_gen: v7x
topology: tpu7x:2x2x1
jax: 0.10.0
libtpu: 0.0.40
codegen_flags: <defaults>
</compile_context>

<pallas_src>
import math
import functools

import jax
import jax.numpy as jnp
from jax.experimental import pallas as pl
from jax.experimental.pallas import tpu as pltpu

_EPS = 1e-5                 # PyTorch BatchNorm default eps
_TWO_PI = 2.0 * math.pi


def _bn_train(h, gamma, beta, axes, count):
    """Training-mode BatchNorm with one-pass (sum, sum-of-squares) statistics.

    `axes` are the reduction axes (everything except the channel axis);
    reductions are issued one axis at a time (lane reduce, then leading-dim
    add) so lowering stays on the well-trodden single-axis path.
    """
    inv = 1.0 / float(count)
    s = h
    ss = h * h
    for ax in sorted(axes, reverse=True):
        s = jnp.sum(s, axis=ax, keepdims=True)
        ss = jnp.sum(ss, axis=ax, keepdims=True)
    mean = s * inv
    var = jnp.maximum(ss * inv - mean * mean, 0.0)       # biased variance
    scale = gamma * jax.lax.rsqrt(var + _EPS)
    shift = beta - mean * scale
    return h * scale + shift                             # fused scale/shift


def _transform_net_kernel(
    x_ref,                                          # (B, 2, N)  points (NCW)
    w1x_ref, w1y_ref, b1_ref, g1_ref, be1_ref,      # conv1 + bn1, all (1,16,1)
    w2_ref, b2_ref, g2_ref, be2_ref,                # conv2 (32,16) + bn2 (1,32,1)
    wf1t_ref, bf1_ref, g3_ref, be3_ref,             # fc1 (32,24) + bn3 (1,24)
    wf2t_ref, bf2_ref,                              # fc2 padded (24,4), (1,4)
    out_pts_ref,                                    # (B, 2, N) transformed points
    tt_ref,                                         # (B, 4)  [tx, ty, theta, 0]
    *, batch, n_pts,
):
    x = x_ref[...]                                  # (B, 2, N) f32
    px = x[:, 0:1, :]                               # (B, 1, N)
    py = x[:, 1:2, :]                               # (B, 1, N)
    n_total = batch * n_pts

    # --- conv1 (1x1, 2->16): broadcast VPU FMAs (contraction dim is only 2),
    #     then bn1 over (batch, points).
    h1 = w1x_ref[...] * px + w1y_ref[...] * py + b1_ref[...]        # (B,16,N)
    h1 = _bn_train(h1, g1_ref[...], be1_ref[...], (0, 2), n_total)

    # --- conv2 (1x1, 16->32): one batched matmul, N stays lane-dense; bn2.
    w2b = jnp.broadcast_to(w2_ref[...], (batch, 32, 16))            # (B,32,16)
    h2 = jnp.einsum("boc,bcn->bon", w2b, h1,
                    preferred_element_type=jnp.float32) + b2_ref[...]  # (B,32,N)
    h2 = _bn_train(h2, g2_ref[...], be2_ref[...], (0, 2), n_total)

    # --- max over points, per batch element (torch.max(x, 2)[0])
    g = jnp.max(h2, axis=2)                                         # (B, 32)

    # --- fc1 + bn3 (2-D BatchNorm1d: stats over the batch dim)
    f1 = jnp.dot(g, wf1t_ref[...], preferred_element_type=jnp.float32) + bf1_ref[...]
    f1 = _bn_train(f1, g3_ref[...], be3_ref[...], (0,), batch)      # (B, 24)

    # --- fc2 (padded to 4 outputs) -> packed small output [tx, ty, theta, 0]
    out4 = jnp.dot(f1, wf2t_ref[...], preferred_element_type=jnp.float32) + bf2_ref[...]
    col = jax.lax.broadcasted_iota(jnp.int32, out4.shape, 1)
    tt = jnp.where(col == 2, jnp.clip(out4, 0.0, _TWO_PI), out4)    # clamp theta
    tt_ref[...] = tt                                                # (B, 4)

    # --- apply per-batch rotation + translation (fully vectorized)
    theta = tt[:, 2:3]                                              # (B, 1)
    c = jnp.cos(theta)[:, :, None]                                  # (B, 1, 1)
    s = jnp.sin(theta)[:, :, None]
    tx = tt[:, 0:1][:, :, None]
    ty = tt[:, 1:2][:, :, None]
    ox = c * px - s * py + tx                                       # (B, 1, N)
    oy = s * px + c * py + ty                                       # (B, 1, N)
    out_pts_ref[...] = jnp.concatenate([ox, oy], axis=1)            # (B, 2, N)


def transform_net(x, params):
    """x: (B, 2, N) float32 (PyTorch Conv1d layout).

    Returns (transformed (B,2,N), translation (B,2), theta (B,)).
    """
    B, C, N = x.shape
    assert C == 2
    vmem = pl.BlockSpec(memory_space=pltpu.MemorySpace.VMEM)
    kernel = functools.partial(_transform_net_kernel, batch=B, n_pts=N)

    inputs = (
        x,
        params["w1x"], params["w1y"], params["b1"], params["g1"], params["be1"],
        params["w2"], params["b2"], params["g2"], params["be2"],
        params["wf1t"], params["bf1"], params["g3"], params["be3"],
        params["wf2t"], params["bf2"],
    )

    out_pts, tt = pl.pallas_call(
        kernel,
        out_shape=(
            jax.ShapeDtypeStruct((B, 2, N), jnp.float32),
            jax.ShapeDtypeStruct((B, 4), jnp.float32),
        ),
        in_specs=[vmem] * len(inputs),
        out_specs=(vmem, vmem),
        compiler_params=pltpu.CompilerParams(
            vmem_limit_bytes=64 * 1024 * 1024),     # headroom for larger scans
    )(*inputs)

    trans = tt[:, 0:2]
    theta = tt[:, 2]
    return out_pts, trans, theta


def init_params(key):
    """Deterministic synthetic parameters matching the PyTorch module shapes,
    stored in kernel-friendly broadcastable layouts:
      - conv1 weight split into per-input-channel columns shaped (1, 16, 1)
      - conv/linear biases + BN affine params shaped (1, C, 1) or (1, C)
      - fc weights pre-transposed to (in, out); fc2 zero-padded from 3 to 4
        outputs so the small result is a single packed (B, 4) store.
    """
    ks = jax.random.split(key, 8)
    f32 = jnp.float32

    def u(k, shape, fan_in):
        bound = 1.0 / math.sqrt(fan_in)
        return jax.random.uniform(k, shape, f32, -bound, bound)

    w1 = u(ks[0], (16, 2), 2)        # Conv1d(2, 16, 1) weight
    b1 = u(ks[1], (16,), 2)
    w2 = u(ks[2], (32, 16), 16)      # Conv1d(16, 32, 1) weight
    b2 = u(ks[3], (32,), 16)
    wf1 = u(ks[4], (24, 32), 32)     # Linear(32, 24)
    bf1 = u(ks[5], (24,), 32)
    wf2 = u(ks[6], (3, 24), 24)      # Linear(24, 3)
    bf2 = u(ks[7], (3,), 24)

    params = {
        "w1x": w1[:, 0].reshape(1, 16, 1),
        "w1y": w1[:, 1].reshape(1, 16, 1),
        "b1":  b1.reshape(1, 16, 1),
        "g1":  jnp.ones((1, 16, 1), f32),
        "be1": jnp.zeros((1, 16, 1), f32),

        "w2":  w2,                               # (32, 16)
        "b2":  b2.reshape(1, 32, 1),
        "g2":  jnp.ones((1, 32, 1), f32),
        "be2": jnp.zeros((1, 32, 1), f32),

        "wf1t": wf1.T,                           # (32, 24)
        "bf1":  bf1.reshape(1, 24),
        "g3":   jnp.ones((1, 24), f32),
        "be3":  jnp.zeros((1, 24), f32),

        "wf2t": jnp.concatenate([wf2.T, jnp.zeros((24, 1), f32)], axis=1),  # (24, 4)
        "bf2":  jnp.concatenate([bf2, jnp.zeros((1,), f32)]).reshape(1, 4),
    }
    return params


if __name__ == "__main__":
    key = jax.random.PRNGKey(0)
    k_param, k_x = jax.random.split(key)

    B, C, N = 2, 2, 16
    x = jax.random.normal(k_x, (B, C, N), jnp.float32)
    params = init_params(k_param)

    transformed, translation, theta = jax.jit(transform_net)(x, params)
    jax.block_until_ready((transformed, translation, theta))

    assert transformed.shape == (B, 2, N)
    assert translation.shape == (B, 2)
    assert theta.shape == (B,)
    print("KERNEL_OK")
</pallas_src>

<mosaic_0001>
module attributes {stable_mosaic.version = 11 : i64} {
  func.func @_transform_net_kernel(%arg0: memref<2x2x16xf32, #tpu.memory_space<vmem>>, %arg1: memref<1x16x1xf32, #tpu.memory_space<vmem>>, %arg2: memref<1x16x1xf32, #tpu.memory_space<vmem>>, %arg3: memref<1x16x1xf32, #tpu.memory_space<vmem>>, %arg4: memref<1x16x1xf32, #tpu.memory_space<vmem>>, %arg5: memref<1x16x1xf32, #tpu.memory_space<vmem>>, %arg6: memref<32x16xf32, #tpu.memory_space<vmem>>, %arg7: memref<1x32x1xf32, #tpu.memory_space<vmem>>, %arg8: memref<1x32x1xf32, #tpu.memory_space<vmem>>, %arg9: memref<1x32x1xf32, #tpu.memory_space<vmem>>, %arg10: memref<32x24xf32, #tpu.memory_space<vmem>>, %arg11: memref<1x24xf32, #tpu.memory_space<vmem>>, %arg12: memref<1x24xf32, #tpu.memory_space<vmem>>, %arg13: memref<1x24xf32, #tpu.memory_space<vmem>>, %arg14: memref<24x4xf32, #tpu.memory_space<vmem>>, %arg15: memref<1x4xf32, #tpu.memory_space<vmem>>, %arg16: memref<2x2x16xf32, #tpu.memory_space<vmem>>, %arg17: memref<2x4xf32, #tpu.memory_space<vmem>>) attributes {dimension_semantics = [], scalar_prefetch = 0 : i64, scratch_operands = 0 : i64, tpu.core_type = #tpu.core_type<tc>} {
    %c0 = arith.constant 0 : index
    %c0_0 = arith.constant 0 : index
    %c0_1 = arith.constant 0 : index
    %0 = vector.load %arg0[%c0, %c0_0, %c0_1] : memref<2x2x16xf32, #tpu.memory_space<vmem>>, vector<2x2x16xf32>
    %1 = vector.extract_strided_slice %0 {offsets = [0, 0, 0], sizes = [2, 1, 16], strides = [1, 1, 1]} : vector<2x2x16xf32> to vector<2x1x16xf32>
    %2 = vector.extract_strided_slice %0 {offsets = [0, 1, 0], sizes = [2, 1, 16], strides = [1, 1, 1]} : vector<2x2x16xf32> to vector<2x1x16xf32>
    %c0_2 = arith.constant 0 : index
    %c0_3 = arith.constant 0 : index
    %c0_4 = arith.constant 0 : index
    %3 = vector.load %arg1[%c0_2, %c0_3, %c0_4] : memref<1x16x1xf32, #tpu.memory_space<vmem>>, vector<1x16x1xf32>
    %4 = vector.broadcast %3 : vector<1x16x1xf32> to vector<2x16x16xf32>
    %5 = vector.broadcast %1 : vector<2x1x16xf32> to vector<2x16x16xf32>
    %6 = arith.mulf %4, %5 : vector<2x16x16xf32>
    %c0_5 = arith.constant 0 : index
    %c0_6 = arith.constant 0 : index
    %c0_7 = arith.constant 0 : index
    %7 = vector.load %arg2[%c0_5, %c0_6, %c0_7] : memref<1x16x1xf32, #tpu.memory_space<vmem>>, vector<1x16x1xf32>
    %8 = vector.broadcast %7 : vector<1x16x1xf32> to vector<2x16x16xf32>
    %9 = vector.broadcast %2 : vector<2x1x16xf32> to vector<2x16x16xf32>
    %10 = arith.mulf %8, %9 : vector<2x16x16xf32>
    %11 = arith.addf %6, %10 : vector<2x16x16xf32>
    %c0_8 = arith.constant 0 : index
    %c0_9 = arith.constant 0 : index
    %c0_10 = arith.constant 0 : index
    %12 = vector.load %arg3[%c0_8, %c0_9, %c0_10] : memref<1x16x1xf32, #tpu.memory_space<vmem>>, vector<1x16x1xf32>
    %13 = vector.broadcast %12 : vector<1x16x1xf32> to vector<2x16x16xf32>
    %14 = arith.addf %11, %13 : vector<2x16x16xf32>
    %c0_11 = arith.constant 0 : index
    %c0_12 = arith.constant 0 : index
    %c0_13 = arith.constant 0 : index
    %15 = vector.load %arg4[%c0_11, %c0_12, %c0_13] : memref<1x16x1xf32, #tpu.memory_space<vmem>>, vector<1x16x1xf32>
    %c0_14 = arith.constant 0 : index
    %c0_15 = arith.constant 0 : index
    %c0_16 = arith.constant 0 : index
    %16 = vector.load %arg5[%c0_14, %c0_15, %c0_16] : memref<1x16x1xf32, #tpu.memory_space<vmem>>, vector<1x16x1xf32>
    %17 = arith.mulf %14, %14 : vector<2x16x16xf32>
    %cst = arith.constant dense<0.000000e+00> : vector<2x16xf32>
    %18 = vector.multi_reduction <add>, %14, %cst [2] : vector<2x16x16xf32> to vector<2x16xf32>
    %19 = vector.shape_cast %18 : vector<2x16xf32> to vector<2x16x1xf32>
    %cst_17 = arith.constant dense<0.000000e+00> : vector<2x16xf32>
    %20 = vector.multi_reduction <add>, %17, %cst_17 [2] : vector<2x16x16xf32> to vector<2x16xf32>
    %21 = vector.shape_cast %20 : vector<2x16xf32> to vector<2x16x1xf32>
    %cst_18 = arith.constant dense<0.000000e+00> : vector<16x1xf32>
    %22 = vector.multi_reduction <add>, %19, %cst_18 [0] : vector<2x16x1xf32> to vector<16x1xf32>
    %23 = vector.shape_cast %22 : vector<16x1xf32> to vector<1x16x1xf32>
    %cst_19 = arith.constant dense<0.000000e+00> : vector<16x1xf32>
    %24 = vector.multi_reduction <add>, %21, %cst_19 [0] : vector<2x16x1xf32> to vector<16x1xf32>
    %25 = vector.shape_cast %24 : vector<16x1xf32> to vector<1x16x1xf32>
    %cst_20 = arith.constant 3.125000e-02 : f32
    %26 = vector.broadcast %cst_20 : f32 to vector<1x16x1xf32>
    %27 = arith.mulf %23, %26 : vector<1x16x1xf32>
    %cst_21 = arith.constant 3.125000e-02 : f32
    %28 = vector.broadcast %cst_21 : f32 to vector<1x16x1xf32>
    %29 = arith.mulf %25, %28 : vector<1x16x1xf32>
    %30 = arith.mulf %27, %27 : vector<1x16x1xf32>
    %31 = arith.subf %29, %30 : vector<1x16x1xf32>
    %cst_22 = arith.constant 0.000000e+00 : f32
    %32 = vector.broadcast %cst_22 : f32 to vector<1x16x1xf32>
    %33 = arith.maximumf %31, %32 : vector<1x16x1xf32>
    %cst_23 = arith.constant 9.99999974E-6 : f32
    %34 = vector.broadcast %cst_23 : f32 to vector<1x16x1xf32>
    %35 = arith.addf %33, %34 : vector<1x16x1xf32>
    %36 = math.rsqrt %35 : vector<1x16x1xf32>
    %37 = arith.mulf %15, %36 : vector<1x16x1xf32>
    %38 = arith.mulf %27, %37 : vector<1x16x1xf32>
    %39 = arith.subf %16, %38 : vector<1x16x1xf32>
    %40 = vector.broadcast %37 : vector<1x16x1xf32> to vector<2x16x16xf32>
    %41 = arith.mulf %14, %40 : vector<2x16x16xf32>
    %42 = vector.broadcast %39 : vector<1x16x1xf32> to vector<2x16x16xf32>
    %43 = arith.addf %41, %42 : vector<2x16x16xf32>
    %c0_24 = arith.constant 0 : index
    %c0_25 = arith.constant 0 : index
    %44 = vector.load %arg6[%c0_24, %c0_25] : memref<32x16xf32, #tpu.memory_space<vmem>>, vector<32x16xf32>
    %45 = vector.shape_cast %44 : vector<32x16xf32> to vector<1x32x16xf32>
    %46 = vector.broadcast %45 : vector<1x32x16xf32> to vector<2x32x16xf32>
    "tpu.trace_start"() <{level = 10 : i32, message = "boc,bcn->bon"}> : () -> ()
    %cst_26 = arith.constant dense<0.000000e+00> : vector<2x32x16xf32>
    %47 = tpu.matmul %46, %43, %cst_26 {dimension_numbers = #tpu.dot_dimension_numbers<[2], [1], [1], [2], [0, 0, 0, 1, 1, 2], [0], [0]>} : vector<2x32x16xf32>, vector<2x16x16xf32>, vector<2x32x16xf32> -> vector<2x32x16xf32>
    "tpu.trace_stop"() : () -> ()
    %c0_27 = arith.constant 0 : index
    %c0_28 = arith.constant 0 : index
    %c0_29 = arith.constant 0 : index
    %48 = vector.load %arg7[%c0_27, %c0_28, %c0_29] : memref<1x32x1xf32, #tpu.memory_space<vmem>>, vector<1x32x1xf32>
    %49 = vector.broadcast %48 : vector<1x32x1xf32> to vector<2x32x16xf32>
    %50 = arith.addf %47, %49 : vector<2x32x16xf32>
    %c0_30 = arith.constant 0 : index
    %c0_31 = arith.constant 0 : index
    %c0_32 = arith.constant 0 : index
    %51 = vector.load %arg8[%c0_30, %c0_31, %c0_32] : memref<1x32x1xf32, #tpu.memory_space<vmem>>, vector<1x32x1xf32>
    %c0_33 = arith.constant 0 : index
    %c0_34 = arith.constant 0 : index
    %c0_35 = arith.constant 0 : index
    %52 = vector.load %arg9[%c0_33, %c0_34, %c0_35] : memref<1x32x1xf32, #tpu.memory_space<vmem>>, vector<1x32x1xf32>
    %53 = arith.mulf %50, %50 : vector<2x32x16xf32>
    %cst_36 = arith.constant dense<0.000000e+00> : vector<2x32xf32>
    %54 = vector.multi_reduction <add>, %50, %cst_36 [2] : vector<2x32x16xf32> to vector<2x32xf32>
    %55 = vector.shape_cast %54 : vector<2x32xf32> to vector<2x32x1xf32>
    %cst_37 = arith.constant dense<0.000000e+00> : vector<2x32xf32>
    %56 = vector.multi_reduction <add>, %53, %cst_37 [2] : vector<2x32x16xf32> to vector<2x32xf32>
    %57 = vector.shape_cast %56 : vector<2x32xf32> to vector<2x32x1xf32>
    %cst_38 = arith.constant dense<0.000000e+00> : vector<32x1xf32>
    %58 = vector.multi_reduction <add>, %55, %cst_38 [0] : vector<2x32x1xf32> to vector<32x1xf32>
    %59 = vector.shape_cast %58 : vector<32x1xf32> to vector<1x32x1xf32>
    %cst_39 = arith.constant dense<0.000000e+00> : vector<32x1xf32>
    %60 = vector.multi_reduction <add>, %57, %cst_39 [0] : vector<2x32x1xf32> to vector<32x1xf32>
    %61 = vector.shape_cast %60 : vector<32x1xf32> to vector<1x32x1xf32>
    %cst_40 = arith.constant 3.125000e-02 : f32
    %62 = vector.broadcast %cst_40 : f32 to vector<1x32x1xf32>
    %63 = arith.mulf %59, %62 : vector<1x32x1xf32>
    %cst_41 = arith.constant 3.125000e-02 : f32
    %64 = vector.broadcast %cst_41 : f32 to vector<1x32x1xf32>
    %65 = arith.mulf %61, %64 : vector<1x32x1xf32>
    %66 = arith.mulf %63, %63 : vector<1x32x1xf32>
    %67 = arith.subf %65, %66 : vector<1x32x1xf32>
    %cst_42 = arith.constant 0.000000e+00 : f32
    %68 = vector.broadcast %cst_42 : f32 to vector<1x32x1xf32>
    %69 = arith.maximumf %67, %68 : vector<1x32x1xf32>
    %cst_43 = arith.constant 9.99999974E-6 : f32
    %70 = vector.broadcast %cst_43 : f32 to vector<1x32x1xf32>
    %71 = arith.addf %69, %70 : vector<1x32x1xf32>
    %72 = math.rsqrt %71 : vector<1x32x1xf32>
    %73 = arith.mulf %51, %72 : vector<1x32x1xf32>
    %74 = arith.mulf %63, %73 : vector<1x32x1xf32>
    %75 = arith.subf %52, %74 : vector<1x32x1xf32>
    %76 = vector.broadcast %73 : vector<1x32x1xf32> to vector<2x32x16xf32>
    %77 = arith.mulf %50, %76 : vector<2x32x16xf32>
    %78 = vector.broadcast %75 : vector<1x32x1xf32> to vector<2x32x16xf32>
    %79 = arith.addf %77, %78 : vector<2x32x16xf32>
    %cst_44 = arith.constant dense<0xFF800000> : vector<2x32xf32>
    %80 = vector.multi_reduction <maximumf>, %79, %cst_44 [2] : vector<2x32x16xf32> to vector<2x32xf32>
    %c0_45 = arith.constant 0 : index
    %c0_46 = arith.constant 0 : index
    %81 = vector.load %arg10[%c0_45, %c0_46] : memref<32x24xf32, #tpu.memory_space<vmem>>, vector<32x24xf32>
    %cst_47 = arith.constant dense<0.000000e+00> : vector<2x24xf32>
    %82 = tpu.matmul %80, %81, %cst_47 {dimension_numbers = #tpu.dot_dimension_numbers<[1], [0], [0], [1], [0, 0, 1, 1], [], []>} : vector<2x32xf32>, vector<32x24xf32>, vector<2x24xf32> -> vector<2x24xf32>
    %c0_48 = arith.constant 0 : index
    %c0_49 = arith.constant 0 : index
    %83 = vector.load %arg11[%c0_48, %c0_49] : memref<1x24xf32, #tpu.memory_space<vmem>>, vector<1x24xf32>
    %84 = vector.broadcast %83 : vector<1x24xf32> to vector<2x24xf32>
    %85 = arith.addf %82, %84 : vector<2x24xf32>
    %c0_50 = arith.constant 0 : index
    %c0_51 = arith.constant 0 : index
    %86 = vector.load %arg12[%c0_50, %c0_51] : memref<1x24xf32, #tpu.memory_space<vmem>>, vector<1x24xf32>
    %c0_52 = arith.constant 0 : index
    %c0_53 = arith.constant 0 : index
    %87 = vector.load %arg13[%c0_52, %c0_53] : memref<1x24xf32, #tpu.memory_space<vmem>>, vector<1x24xf32>
    %88 = arith.mulf %85, %85 : vector<2x24xf32>
    %cst_54 = arith.constant dense<0.000000e+00> : vector<24xf32>
    %89 = vector.multi_reduction <add>, %85, %cst_54 [0] : vector<2x24xf32> to vector<24xf32>
    %90 = vector.shape_cast %89 : vector<24xf32> to vector<1x24xf32>
    %cst_55 = arith.constant dense<0.000000e+00> : vector<24xf32>
    %91 = vector.multi_reduction <add>, %88, %cst_55 [0] : vector<2x24xf32> to vector<24xf32>
    %92 = vector.shape_cast %91 : vector<24xf32> to vector<1x24xf32>
    %cst_56 = arith.constant 5.000000e-01 : f32
    %93 = vector.broadcast %cst_56 : f32 to vector<1x24xf32>
    %94 = arith.mulf %90, %93 : vector<1x24xf32>
    %cst_57 = arith.constant 5.000000e-01 : f32
    %95 = vector.broadcast %cst_57 : f32 to vector<1x24xf32>
    %96 = arith.mulf %92, %95 : vector<1x24xf32>
    %97 = arith.mulf %94, %94 : vector<1x24xf32>
    %98 = arith.subf %96, %97 : vector<1x24xf32>
    %cst_58 = arith.constant 0.000000e+00 : f32
    %99 = vector.broadcast %cst_58 : f32 to vector<1x24xf32>
    %100 = arith.maximumf %98, %99 : vector<1x24xf32>
    %cst_59 = arith.constant 9.99999974E-6 : f32
    %101 = vector.broadcast %cst_59 : f32 to vector<1x24xf32>
    %102 = arith.addf %100, %101 : vector<1x24xf32>
    %103 = math.rsqrt %102 : vector<1x24xf32>
    %104 = arith.mulf %86, %103 : vector<1x24xf32>
    %105 = arith.mulf %94, %104 : vector<1x24xf32>
    %106 = arith.subf %87, %105 : vector<1x24xf32>
    %107 = vector.broadcast %104 : vector<1x24xf32> to vector<2x24xf32>
    %108 = arith.mulf %85, %107 : vector<2x24xf32>
    %109 = vector.broadcast %106 : vector<1x24xf32> to vector<2x24xf32>
    %110 = arith.addf %108, %109 : vector<2x24xf32>
    %c0_60 = arith.constant 0 : index
    %c0_61 = arith.constant 0 : index
    %111 = vector.load %arg14[%c0_60, %c0_61] : memref<24x4xf32, #tpu.memory_space<vmem>>, vector<24x4xf32>
    %cst_62 = arith.constant dense<0.000000e+00> : vector<2x4xf32>
    %112 = tpu.matmul %110, %111, %cst_62 {dimension_numbers = #tpu.dot_dimension_numbers<[1], [0], [0], [1], [0, 0, 1, 1], [], []>} : vector<2x24xf32>, vector<24x4xf32>, vector<2x4xf32> -> vector<2x4xf32>
    %c0_63 = arith.constant 0 : index
    %c0_64 = arith.constant 0 : index
    %113 = vector.load %arg15[%c0_63, %c0_64] : memref<1x4xf32, #tpu.memory_space<vmem>>, vector<1x4xf32>
    %114 = vector.broadcast %113 : vector<1x4xf32> to vector<2x4xf32>
    %115 = arith.addf %112, %114 : vector<2x4xf32>
    %116 = tpu.iota {dimensions = array<i32: 1>} : vector<2x4xi32>
    %c2_i32 = arith.constant 2 : i32
    %117 = vector.broadcast %c2_i32 : i32 to vector<2x4xi32>
    %118 = arith.cmpi eq, %116, %117 : vector<2x4xi32>
    %cst_65 = arith.constant 0.000000e+00 : f32
    %cst_66 = arith.constant 6.28318548 : f32
    %119 = vector.broadcast %cst_65 : f32 to vector<2x4xf32>
    %120 = arith.maximumf %119, %115 : vector<2x4xf32>
    %121 = vector.broadcast %cst_66 : f32 to vector<2x4xf32>
    %122 = arith.minimumf %121, %120 : vector<2x4xf32>
    %123 = arith.select %118, %122, %115 : vector<2x4xi1>, vector<2x4xf32>
    %c0_67 = arith.constant 0 : index
    %c0_68 = arith.constant 0 : index
    %124 = vector.load %arg17[%c0_67, %c0_68] : memref<2x4xf32, #tpu.memory_space<vmem>>, vector<2x4xf32>
    tpu.vector_store %arg17[%c0_67, %c0_68], %123 {strides = array<i32>} : memref<2x4xf32, #tpu.memory_space<vmem>>, vector<2x4xf32>,
    %125 = vector.extract_strided_slice %123 {offsets = [0, 2], sizes = [2, 1], strides = [1, 1]} : vector<2x4xf32> to vector<2x1xf32>
    %126 = math.cos %125 : vector<2x1xf32>
    %127 = vector.shape_cast %126 : vector<2x1xf32> to vector<2x1x1xf32>
    %128 = math.sin %125 : vector<2x1xf32>
    %129 = vector.shape_cast %128 : vector<2x1xf32> to vector<2x1x1xf32>
    %130 = vector.extract_strided_slice %123 {offsets = [0, 0], sizes = [2, 1], strides = [1, 1]} : vector<2x4xf32> to vector<2x1xf32>
    %131 = vector.shape_cast %130 : vector<2x1xf32> to vector<2x1x1xf32>
    %132 = vector.extract_strided_slice %123 {offsets = [0, 1], sizes = [2, 1], strides = [1, 1]} : vector<2x4xf32> to vector<2x1xf32>
    %133 = vector.shape_cast %132 : vector<2x1xf32> to vector<2x1x1xf32>
    %134 = vector.broadcast %127 : vector<2x1x1xf32> to vector<2x1x16xf32>
    %135 = arith.mulf %134, %1 : vector<2x1x16xf32>
    %136 = vector.broadcast %129 : vector<2x1x1xf32> to vector<2x1x16xf32>
    %137 = arith.mulf %136, %2 : vector<2x1x16xf32>
    %138 = arith.subf %135, %137 : vector<2x1x16xf32>
    %139 = vector.broadcast %131 : vector<2x1x1xf32> to vector<2x1x16xf32>
    %140 = arith.addf %138, %139 : vector<2x1x16xf32>
    %141 = vector.broadcast %129 : vector<2x1x1xf32> to vector<2x1x16xf32>
    %142 = arith.mulf %141, %1 : vector<2x1x16xf32>
    %143 = vector.broadcast %127 : vector<2x1x1xf32> to vector<2x1x16xf32>
    %144 = arith.mulf %143, %2 : vector<2x1x16xf32>
    %145 = arith.addf %142, %144 : vector<2x1x16xf32>
    %146 = vector.broadcast %133 : vector<2x1x1xf32> to vector<2x1x16xf32>
    %147 = arith.addf %145, %146 : vector<2x1x16xf32>
    %148 = tpu.concatenate %140, %147 in 1 : vector<2x1x16xf32>, vector<2x1x16xf32> -> vector<2x2x16xf32>
    %c0_69 = arith.constant 0 : index
    %c0_70 = arith.constant 0 : index
    %c0_71 = arith.constant 0 : index
    %149 = vector.load %arg16[%c0_69, %c0_70, %c0_71] : memref<2x2x16xf32, #tpu.memory_space<vmem>>, vector<2x2x16xf32>
    tpu.vector_store %arg16[%c0_69, %c0_70, %c0_71], %148 {strides = array<i32>} : memref<2x2x16xf32, #tpu.memory_space<vmem>>, vector<2x2x16xf32>,
    return
  }
}

</mosaic_0001>

<llo_original>
// kernel: transform_net.1
$region0: #{transform_net.1}
  #allocation0 [shape = 'u32[]', space=smem, size = 0x4, offset = 0x4, fixed_abs, tag = 'smem constant byte address 0x4 - core index']
  #allocation1 [shape = 'u32[144,128]{1,0:T(1,128)}', space=vmem, size = 0x12000, scoped, tag = 'internal scratch']
  %s0 = inlined_call_operand.hbm [shape: f32[2,2,16], index: 0, kind: input, shape index: {}]
  %s1 = inlined_call_operand.hbm [shape: f32[1,16,1], index: 1, kind: input, shape index: {}]
  %s2 = inlined_call_operand.hbm [shape: f32[1,16,1], index: 2, kind: input, shape index: {}]
  %s3 = inlined_call_operand.hbm [shape: f32[1,16,1], index: 3, kind: input, shape index: {}]
  %s4 = inlined_call_operand.hbm [shape: f32[1,16,1], index: 4, kind: input, shape index: {}]
  %s5 = inlined_call_operand.hbm [shape: f32[1,16,1], index: 5, kind: input, shape index: {}]
  %s6 = inlined_call_operand.hbm [shape: f32[32,16], index: 6, kind: input, shape index: {}]
  %s7 = inlined_call_operand.hbm [shape: f32[1,32,1], index: 7, kind: input, shape index: {}]
  %s8 = inlined_call_operand.hbm [shape: f32[1,32,1], index: 8, kind: input, shape index: {}]
  %s9 = inlined_call_operand.hbm [shape: f32[1,32,1], index: 9, kind: input, shape index: {}]
  %s10 = inlined_call_operand.hbm [shape: f32[32,24], index: 10, kind: input, shape index: {}]
  %s11 = inlined_call_operand.hbm [shape: f32[1,24], index: 11, kind: input, shape index: {}]
  %s12 = inlined_call_operand.hbm [shape: f32[1,24], index: 12, kind: input, shape index: {}]
  %s13 = inlined_call_operand.hbm [shape: f32[1,24], index: 13, kind: input, shape index: {}]
  %s14 = inlined_call_operand.hbm [shape: f32[24,4], index: 14, kind: input, shape index: {}]
  %s15 = inlined_call_operand.hbm [shape: f32[1,4], index: 15, kind: input, shape index: {}]
  %s16 = inlined_call_operand.hbm [shape: f32[2,2,16], index: 16, kind: output, shape index: {0}]
  %s17 = inlined_call_operand.hbm [shape: f32[2,4], index: 17, kind: output, shape index: {1}]
  %18 = xla_tuple %s16, %s17
  %s19 = sld [smem:[#allocation0]]
  $region146: #{transform_net.1} parent=0
    _
  %s21 = ssub.s32 1, %s19
  %s22 = scalar_select 0, %s21, %s19
  $region1: #{transform_net.1} parent=0
    #allocation2 [shape = 'u8[2048]{0}', space=vmem, size = 0x800, scoped, tag = 'input window, operand 0, single buffered']
    #allocation3 [shape = 's32[1]{0}', space=sflag, size = 0x4, scoped, tag = 'scoped memory for transform_net.1']
    #allocation4 [shape = 's32[1]{0}', space=sflag, size = 0x4, scoped, tag = 'scoped memory for transform_net.1']
    #allocation5 [shape = 'u8[8192]{0}', space=vmem, size = 0x2000, scoped, tag = 'input window, operand 1, single buffered']
    #allocation6 [shape = 's32[1]{0}', space=sflag, size = 0x4, scoped, tag = 'scoped memory for transform_net.1']
    #allocation7 [shape = 'u8[8192]{0}', space=vmem, size = 0x2000, scoped, tag = 'input window, operand 2, single buffered']
    #allocation8 [shape = 'u8[8192]{0}', space=vmem, size = 0x2000, scoped, tag = 'input window, operand 3, single buffered']
    #allocation9 [shape = 's32[1]{0}', space=sflag, size = 0x4, scoped, tag = 'scoped memory for transform_net.1']
    #allocation10 [shape = 'u8[8192]{0}', space=vmem, size = 0x2000, scoped, tag = 'input window, operand 4, single buffered']
    #allocation11 [shape = 'u8[8192]{0}', space=vmem, size = 0x2000, scoped, tag = 'input window, operand 5, single buffered']
    #allocation12 [shape = 's32[1]{0}', space=sflag, size = 0x4, scoped, tag = 'scoped memory for transform_net.1']
    #allocation13 [shape = 'u8[16384]{0}', space=vmem, size = 0x4000, scoped, tag = 'input window, operand 6, single buffered']
    #allocation14 [shape = 'u8[16384]{0}', space=vmem, size = 0x4000, scoped, tag = 'input window, operand 7, single buffered']
    #allocation15 [shape = 's32[1]{0}', space=sflag, size = 0x4, scoped, tag = 'scoped memory for transform_net.1']
    #allocation16 [shape = 'u8[16384]{0}', space=vmem, size = 0x4000, scoped, tag = 'input window, operand 8, single buffered']
    #allocation17 [shape = 'u8[16384]{0}', space=vmem, size = 0x4000, scoped, tag = 'input window, operand 9, single buffered']
    #allocation18 [shape = 's32[1]{0}', space=sflag, size = 0x4, scoped, tag = 'scoped memory for transform_net.1']
    #allocation19 [shape = 'u8[16384]{0}', space=vmem, size = 0x4000, scoped, tag = 'input window, operand 10, single buffered']
    #allocation20 [shape = 'u8[512]{0}', space=vmem, size = 0x400, scoped, tag = 'input window, operand 11, single buffered']
    #allocation21 [shape = 's32[1]{0}', space=sflag, size = 0x4, scoped, tag = 'scoped memory for transform_net.1']
    #allocation22 [shape = 'u8[512]{0}', space=vmem, size = 0x400, scoped, tag = 'input window, operand 12, single buffered']
    #allocation23 [shape = 'u8[512]{0}', space=vmem, size = 0x400, scoped, tag = 'input window, operand 13, single buffered']
    #allocation24 [shape = 's32[1]{0}', space=sflag, size = 0x4, scoped, tag = 'scoped memory for transform_net.1']
    #allocation25 [shape = 'u8[12288]{0}', space=vmem, size = 0x3000, scoped, tag = 'input window, operand 14, single buffered']
    #allocation26 [shape = 'u8[512]{0}', space=vmem, size = 0x400, scoped, tag = 'input window, operand 15, single buffered']
    #allocation27 [shape = 's32[1]{0}', space=sflag, size = 0x4, scoped, tag = 'scoped memory for transform_net.1']
    #allocation28 [shape = 'u8[2048]{0}', space=vmem, size = 0x800, scoped, tag = 'output window, operand 0, single buffered']
    #allocation29 [shape = 'u8[1024]{0}', space=vmem, size = 0x400, scoped, tag = 'output window, operand 1, single buffered']
    #allocation30 [shape = 's32[1]{0}', space=sflag, size = 0x4, scoped, tag = 'scoped memory for transform_net.1']
    %23 = vsyncpa [#allocation3], 0
    %24 = vsyncpa [#allocation6], 0
    %25 = vsyncpa [#allocation9], 0
    %26 = vsyncpa [#allocation12], 0
    %27 = vsyncpa [#allocation15], 0
    %28 = vsyncpa [#allocation18], 0
    %29 = vsyncpa [#allocation21], 0
    %30 = vsyncpa [#allocation24], 0
    %31 = vsyncpa [#allocation27], 0
    %32 = vsyncpa [#allocation4], 0
    %33 = vsyncpa [#allocation30], 0
    // Predicated region
    $region2: #{transform_net.1} parent=1 // pred_check
      _
    $region3: #{transform_net.1} parent=1 // pred_check_branch
      %35 = sbr.rel (0) target = $region5
    $region4: #{transform_net.1} parent=1 // pred_region
      %s37 = ssub.s32 64, 64
      %38 = vsyncadd [#allocation3], %s37
      %s39 = sshll.u32 [#allocation2], 4
      %s40 = int_to_ptr.vmem [resolvable:$true] %s39
      %45 = dma.hbm_to_vmem [thread:$0]  %s0, 64, %s40, [#allocation3], 32, 32, 2
    $region5: #{transform_net.1} parent=1 // pred_fallthru
      _
    // Predicated region
    $region6: #{transform_net.1} parent=1 // pred_check
      _
    $region7: #{transform_net.1} parent=1 // pred_check_branch
      %47 = sbr.rel (0) target = $region9
    $region8: #{transform_net.1} parent=1 // pred_region
      %s49 = ssub.s32 256, 256
      %50 = vsyncadd [#allocation6], %s49
      %s51 = sshll.u32 [#allocation5], 4
      %s52 = int_to_ptr.vmem [resolvable:$true] %s51
      %57 = dma.hbm_to_vmem [thread:$0]  %s1, 256, %s52, [#allocation6], 128, 128, 8
    $region9: #{transform_net.1} parent=1 // pred_fallthru
      _
    // Predicated region
    $region10: #{transform_net.1} parent=1 // pred_check
      _
    $region11: #{transform_net.1} parent=1 // pred_check_branch
      %59 = sbr.rel (0) target = $region13
    $region12: #{transform_net.1} parent=1 // pred_region
      %s61 = ssub.s32 256, 256
      %62 = vsyncadd [#allocation6], %s61
      %s63 = sshll.u32 [#allocation7], 4
      %s64 = int_to_ptr.vmem [resolvable:$true] %s63
      %69 = dma.hbm_to_vmem [thread:$0]  %s2, 256, %s64, [#allocation6], 128, 128, 8
    $region13: #{transform_net.1} parent=1 // pred_fallthru
      _
    // Predicated region
    $region14: #{transform_net.1} parent=1 // pred_check
      _
    $region15: #{transform_net.1} parent=1 // pred_check_branch
      %71 = sbr.rel (0) target = $region17
    $region16: #{transform_net.1} parent=1 // pred_region
      %s73 = ssub.s32 256, 256
      %74 = vsyncadd [#allocation9], %s73
      %s75 = sshll.u32 [#allocation8], 4
      %s76 = int_to_ptr.vmem [resolvable:$true] %s75
      %81 = dma.hbm_to_vmem [thread:$0]  %s3, 256, %s76, [#allocation9], 128, 128, 8
    $region17: #{transform_net.1} parent=1 // pred_fallthru
      _
    // Predicated region
    $region18: #{transform_net.1} parent=1 // pred_check
      _
    $region19: #{transform_net.1} parent=1 // pred_check_branch
      %83 = sbr.rel (0) target = $region21
    $region20: #{transform_net.1} parent=1 // pred_region
      %s85 = ssub.s32 256, 256
      %86 = vsyncadd [#allocation9], %s85
      %s87 = sshll.u32 [#allocation10], 4
      %s88 = int_to_ptr.vmem [resolvable:$true] %s87
      %93 = dma.hbm_to_vmem [thread:$0]  %s4, 256, %s88, [#allocation9], 128, 128, 8
    $region21: #{transform_net.1} parent=1 // pred_fallthru
      _
    // Predicated region
    $region22: #{transform_net.1} parent=1 // pred_check
      _
    $region23: #{transform_net.1} parent=1 // pred_check_branch
      %95 = sbr.rel (0) target = $region25
    $region24: #{transform_net.1} parent=1 // pred_region
      %s97 = ssub.s32 256, 256
      %98 = vsyncadd [#allocation12], %s97
      %s99 = sshll.u32 [#allocation11], 4
      %s100 = int_to_ptr.vmem [resolvable:$true] %s99
      %105 = dma.hbm_to_vmem [thread:$0]  %s5, 256, %s100, [#allocation12], 128, 128, 8
    $region25: #{transform_net.1} parent=1 // pred_fallthru
      _
    // Predicated region
    $region26: #{transform_net.1} parent=1 // pred_check
      _
    $region27: #{transform_net.1} parent=1 // pred_check_branch
      %107 = sbr.rel (0) target = $region29
    $region28: #{transform_net.1} parent=1 // pred_region
      %s109 = ssub.s32 512, 512
      %110 = vsyncadd [#allocation12], %s109
      %s111 = sshll.u32 [#allocation13], 4
      %s112 = int_to_ptr.vmem [resolvable:$true] %s111
      %117 = dma.hbm_to_vmem [thread:$0]  %s6, 512, %s112, [#allocation12], 128, 128, 8
    $region29: #{transform_net.1} parent=1 // pred_fallthru
      _
    // Predicated region
    $region30: #{transform_net.1} parent=1 // pred_check
      _
    $region31: #{transform_net.1} parent=1 // pred_check_branch
      %119 = sbr.rel (0) target = $region33
    $region32: #{transform_net.1} parent=1 // pred_region
      %s121 = ssub.s32 512, 512
      %122 = vsyncadd [#allocation15], %s121
      %s123 = sshll.u32 [#allocation14], 4
      %s124 = int_to_ptr.vmem [resolvable:$true] %s123
      %129 = dma.hbm_to_vmem [thread:$0]  %s7, 512, %s124, [#allocation15], 128, 128, 8
    $region33: #{transform_net.1} parent=1 // pred_fallthru
      _
    // Predicated region
    $region34: #{transform_net.1} parent=1 // pred_check
      _
    $region35: #{transform_net.1} parent=1 // pred_check_branch
      %131 = sbr.rel (0) target = $region37
    $region36: #{transform_net.1} parent=1 // pred_region
      %s133 = ssub.s32 512, 512
      %134 = vsyncadd [#allocation15], %s133
      %s135 = sshll.u32 [#allocation16], 4
      %s136 = int_to_ptr.vmem [resolvable:$true] %s135
      %141 = dma.hbm_to_vmem [thread:$0]  %s8, 512, %s136, [#allocation15], 128, 128, 8
    $region37: #{transform_net.1} parent=1 // pred_fallthru
      _
    // Predicated region
    $region38: #{transform_net.1} parent=1 // pred_check
      _
    $region39: #{transform_net.1} parent=1 // pred_check_branch
      %143 = sbr.rel (0) target = $region41
    $region40: #{transform_net.1} parent=1 // pred_region
      %s145 = ssub.s32 512, 512
      %146 = vsyncadd [#allocation18], %s145
      %s147 = sshll.u32 [#allocation17], 4
      %s148 = int_to_ptr.vmem [resolvable:$true] %s147
      %153 = dma.hbm_to_vmem [thread:$0]  %s9, 512, %s148, [#allocation18], 128, 128, 8
    $region41: #{transform_net.1} parent=1 // pred_fallthru
      _
    // Predicated region
    $region42: #{transform_net.1} parent=1 // pred_check
      _
    $region43: #{transform_net.1} parent=1 // pred_check_branch
      %155 = sbr.rel (0) target = $region45
    $region44: #{transform_net.1} parent=1 // pred_region
      %s157 = ssub.s32 512, 512
      %158 = vsyncadd [#allocation18], %s157
      %s159 = sshll.u32 [#allocation19], 4
      %s160 = int_to_ptr.vmem [resolvable:$true] %s159
      %165 = dma.hbm_to_vmem [thread:$0]  %s10, 512, %s160, [#allocation18], 128, 128, 8
    $region45: #{transform_net.1} parent=1 // pred_fallthru
      _
    // Predicated region
    $region46: #{transform_net.1} parent=1 // pred_check
      _
    $region47: #{transform_net.1} parent=1 // pred_check_branch
      %167 = sbr.rel (0) target = $region49
    $region48: #{transform_net.1} parent=1 // pred_region
      %s169 = ssub.s32 16, 16
      %170 = vsyncadd [#allocation21], %s169
      %s172 = sshll.u32 [#allocation20], 4
      %s173 = int_to_ptr.vmem [resolvable:$true] %s172
      %175 = dma.hbm_to_vmem [thread:$0]  %s11, 16, %s173, [#allocation21]
    $region49: #{transform_net.1} parent=1 // pred_fallthru
      _
    // Predicated region
    $region50: #{transform_net.1} parent=1 // pred_check
      _
    $region51: #{transform_net.1} parent=1 // pred_check_branch
      %177 = sbr.rel (0) target = $region53
    $region52: #{transform_net.1} parent=1 // pred_region
      %s179 = ssub.s32 16, 16
      %180 = vsyncadd [#allocation21], %s179
      %s182 = sshll.u32 [#allocation22], 4
      %s183 = int_to_ptr.vmem [resolvable:$true] %s182
      %185 = dma.hbm_to_vmem [thread:$0]  %s12, 16, %s183, [#allocation21]
    $region53: #{transform_net.1} parent=1 // pred_fallthru
      _
    // Predicated region
    $region54: #{transform_net.1} parent=1 // pred_check
      _
    $region55: #{transform_net.1} parent=1 // pred_check_branch
      %187 = sbr.rel (0) target = $region57
    $region56: #{transform_net.1} parent=1 // pred_region
      %s189 = ssub.s32 16, 16
      %190 = vsyncadd [#allocation24], %s189
      %s192 = sshll.u32 [#allocation23], 4
      %s193 = int_to_ptr.vmem [resolvable:$true] %s192
      %195 = dma.hbm_to_vmem [thread:$0]  %s13, 16, %s193, [#allocation24]
    $region57: #{transform_net.1} parent=1 // pred_fallthru
      _
    // Predicated region
    $region58: #{transform_net.1} parent=1 // pred_check
      _
    $region59: #{transform_net.1} parent=1 // pred_check_branch
      %197 = sbr.rel (0) target = $region61
    $region60: #{transform_net.1} parent=1 // pred_region
      %s199 = ssub.s32 384, 384
      %200 = vsyncadd [#allocation24], %s199
      %s201 = sshll.u32 [#allocation25], 4
      %s202 = int_to_ptr.vmem [resolvable:$true] %s201
      %207 = dma.hbm_to_vmem [thread:$0]  %s14, 384, %s202, [#allocation24], 128, 128, 8
    $region61: #{transform_net.1} parent=1 // pred_fallthru
      _
    // Predicated region
    $region62: #{transform_net.1} parent=1 // pred_check
      _
    $region63: #{transform_net.1} parent=1 // pred_check_branch
      %209 = sbr.rel (0) target = $region65
    $region64: #{transform_net.1} parent=1 // pred_region
      %s211 = ssub.s32 16, 16
      %212 = vsyncadd [#allocation27], %s211
      %s214 = sshll.u32 [#allocation26], 4
      %s215 = int_to_ptr.vmem [resolvable:$true] %s214
      %217 = dma.hbm_to_vmem [thread:$0]  %s15, 16, %s215, [#allocation27]
    $region65: #{transform_net.1} parent=1 // pred_fallthru
      _
    // Predicated region
    $region66: #{transform_net.1} parent=1 // pred_check
      _
    $region67: #{transform_net.1} parent=1 // pred_check_branch
      %219 = sbr.rel (0) target = $region69
    $region68: #{transform_net.1} parent=1 // pred_region
      %220 = dma.done [#allocation3], 64
    $region69: #{transform_net.1} parent=1 // pred_fallthru
      _
    // Predicated region
    $region70: #{transform_net.1} parent=1 // pred_check
      _
    $region71: #{transform_net.1} parent=1 // pred_check_branch
      %222 = sbr.rel (0) target = $region73
    $region72: #{transform_net.1} parent=1 // pred_region
      %223 = dma.done [#allocation6], 256
    $region73: #{transform_net.1} parent=1 // pred_fallthru
      _
    // Predicated region
    $region74: #{transform_net.1} parent=1 // pred_check
      _
    $region75: #{transform_net.1} parent=1 // pred_check_branch
      %225 = sbr.rel (0) target = $region77
    $region76: #{transform_net.1} parent=1 // pred_region
      %226 = dma.done [#allocation6], 256
    $region77: #{transform_net.1} parent=1 // pred_fallthru
      _
    // Predicated region
    $region78: #{transform_net.1} parent=1 // pred_check
      _
    $region79: #{transform_net.1} parent=1 // pred_check_branch
      %228 = sbr.rel (0) target = $region81
    $region80: #{transform_net.1} parent=1 // pred_region
      %229 = dma.done [#allocation9], 256
    $region81: #{transform_net.1} parent=1 // pred_fallthru
      _
    // Predicated region
    $region82: #{transform_net.1} parent=1 // pred_check
      _
    $region83: #{transform_net.1} parent=1 // pred_check_branch
      %231 = sbr.rel (0) target = $region85
    $region84: #{transform_net.1} parent=1 // pred_region
      %232 = dma.done [#allocation9], 256
    $region85: #{transform_net.1} parent=1 // pred_fallthru
      _
    // Predicated region
    $region86: #{transform_net.1} parent=1 // pred_check
      _
    $region87: #{transform_net.1} parent=1 // pred_check_branch
      %234 = sbr.rel (0) target = $region89
    $region88: #{transform_net.1} parent=1 // pred_region
      %235 = dma.done [#allocation12], 256
    $region89: #{transform_net.1} parent=1 // pred_fallthru
      _
    // Predicated region
    $region90: #{transform_net.1} parent=1 // pred_check
      _
    $region91: #{transform_net.1} parent=1 // pred_check_branch
      %237 = sbr.rel (0) target = $region93
    $region92: #{transform_net.1} parent=1 // pred_region
      %238 = dma.done [#allocation12], 512
    $region93: #{transform_net.1} parent=1 // pred_fallthru
      _
    // Predicated region
    $region94: #{transform_net.1} parent=1 // pred_check
      _
    $region95: #{transform_net.1} parent=1 // pred_check_branch
      %240 = sbr.rel (0) target = $region97
    $region96: #{transform_net.1} parent=1 // pred_region
      %241 = dma.done [#allocation15], 512
    $region97: #{transform_net.1} parent=1 // pred_fallthru
      _
    // Predicated region
    $region98: #{transform_net.1} parent=1 // pred_check
      _
    $region99: #{transform_net.1} parent=1 // pred_check_branch
      %243 = sbr.rel (0) target = $region101
    $region100: #{transform_net.1} parent=1 // pred_region
      %244 = dma.done [#allocation15], 512
    $region101: #{transform_net.1} parent=1 // pred_fallthru
      _
    // Predicated region
    $region102: #{transform_net.1} parent=1 // pred_check
      _
    $region103: #{transform_net.1} parent=1 // pred_check_branch
      %246 = sbr.rel (0) target = $region105
    $region104: #{transform_net.1} parent=1 // pred_region
      %247 = dma.done [#allocation18], 512
    $region105: #{transform_net.1} parent=1 // pred_fallthru
      _
    // Predicated region
    $region106: #{transform_net.1} parent=1 // pred_check
      _
    $region107: #{transform_net.1} parent=1 // pred_check_branch
      %249 = sbr.rel (0) target = $region109
    $region108: #{transform_net.1} parent=1 // pred_region
      %250 = dma.done [#allocation18], 512
    $region109: #{transform_net.1} parent=1 // pred_fallthru
      _
    // Predicated region
    $region110: #{transform_net.1} parent=1 // pred_check
      _
    $region111: #{transform_net.1} parent=1 // pred_check_branch
      %252 = sbr.rel (0) target = $region113
    $region112: #{transform_net.1} parent=1 // pred_region
      %253 = dma.done [#allocation21], 16
    $region113: #{transform_net.1} parent=1 // pred_fallthru
      _
    // Predicated region
    $region114: #{transform_net.1} parent=1 // pred_check
      _
    $region115: #{transform_net.1} parent=1 // pred_check_branch
      %255 = sbr.rel (0) target = $region117
    $region116: #{transform_net.1} parent=1 // pred_region
      %256 = dma.done [#allocation21], 16
    $region117: #{transform_net.1} parent=1 // pred_fallthru
      _
    // Predicated region
    $region118: #{transform_net.1} parent=1 // pred_check
      _
    $region119: #{transform_net.1} parent=1 // pred_check_branch
      %258 = sbr.rel (0) target = $region121
    $region120: #{transform_net.1} parent=1 // pred_region
      %259 = dma.done [#allocation24], 16
    $region121: #{transform_net.1} parent=1 // pred_fallthru
      _
    // Predicated region
    $region122: #{transform_net.1} parent=1 // pred_check
      _
    $region123: #{transform_net.1} parent=1 // pred_check_branch
      %261 = sbr.rel (0) target = $region125
    $region124: #{transform_net.1} parent=1 // pred_region
      %262 = dma.done [#allocation24], 384
    $region125: #{transform_net.1} parent=1 // pred_fallthru
      _
    // Predicated region
    $region126: #{transform_net.1} parent=1 // pred_check
      _
    $region127: #{transform_net.1} parent=1 // pred_check_branch
      %264 = sbr.rel (0) target = $region129
    $region128: #{transform_net.1} parent=1 // pred_region
      %265 = dma.done [#allocation27], 16
    $region129: #{transform_net.1} parent=1 // pred_fallthru
      _
    %v266 = vld [vmem:[#allocation2] sm:$0x3]
    %v267 = vld [vmem:[#allocation2 + $0x2] sm:$0x3]
    %v268 = vld [vmem:[#allocation5] sm:$0xff]
    %v269 = vld [vmem:[#allocation5 + $0x8] sm:$0xff]
    %271 = vset.pattern.permute.xlu0 0
    %272 = vperm.xlu0 %271, %v268
    %v273 = vpop.permute.xlu0 %272
    %276 = vset.pattern.permute.xlu0 0
    %277 = vperm.xlu0 %276, %v269
    %v278 = vpop.permute.xlu0 %277
    %v280 = vlaneseq
    %v281 = vshrl.u32 %v280, 7
    %v282 = vsub.s32 0, %v281
    %v283 = vrot.slane %v266, %v282
    %v284 = vlaneseq
    %v285 = vshrl.u32 %v284, 7
    %v286 = vsub.s32 0, %v285
    %v287 = vrot.slane %v267, %v286
    %v288 = vmul.f32 %v273, %v283
    %v289 = vmul.f32 %v278, %v283
    %v290 = vmul.f32 %v273, %v287
    %v291 = vmul.f32 %v278, %v287
    %v292 = vld [vmem:[#allocation7] sm:$0xff]
    %v293 = vld [vmem:[#allocation7 + $0x8] sm:$0xff]
    %295 = vset.pattern.permute.xlu0 0
    %296 = vperm.xlu0 %295, %v292
    %v297 = vpop.permute.xlu0 %296
    %300 = vset.pattern.permute.xlu0 0
    %301 = vperm.xlu0 %300, %v293
    %v302 = vpop.permute.xlu0 %301
    %v304 = vlaneseq
    %v305 = vshrl.u32 %v304, 7
    %v306 = vsub.s32 1, %v305
    %v307 = vrot.slane %v266, %v306
    %v308 = vlaneseq
    %v309 = vshrl.u32 %v308, 7
    %v310 = vsub.s32 1, %v309
    %v311 = vrot.slane %v267, %v310
    %v312 = vmul.f32 %v297, %v307
    %v313 = vmul.f32 %v302, %v307
    %v314 = vmul.f32 %v297, %v311
    %v315 = vmul.f32 %v302, %v311
    %v316 = vadd.f32 %v288, %v312
    %v317 = vadd.f32 %v289, %v313
    %v318 = vadd.f32 %v290, %v314
    %v319 = vadd.f32 %v291, %v315
    %v320 = vld [vmem:[#allocation8] sm:$0xff]
    %v321 = vld [vmem:[#allocation8 + $0x8] sm:$0xff]
    %323 = vset.pattern.permute.xlu0 0
    %324 = vperm.xlu0 %323, %v320
    %v325 = vpop.permute.xlu0 %324
    %328 = vset.pattern.permute.xlu0 0
    %329 = vperm.xlu0 %328, %v321
    %v330 = vpop.permute.xlu0 %329
    %v332 = vadd.f32 %v316, %v325
    %v333 = vadd.f32 %v317, %v330
    %v334 = vadd.f32 %v318, %v325
    %v335 = vadd.f32 %v319, %v330
    %v336 = vld [vmem:[#allocation10] sm:$0xff]
    %v337 = vld [vmem:[#allocation10 + $0x8] sm:$0xff]
    %v338 = vld [vmem:[#allocation11] sm:$0xff]
    %v339 = vld [vmem:[#allocation11 + $0x8] sm:$0xff]
    %v340 = vmul.f32 %v332, %v332
    %v341 = vmul.f32 %v333, %v333
    %v342 = vmul.f32 %v334, %v334
    %v343 = vmul.f32 %v335, %v335
    %vm344 = vcmask 130048
    %v345 = vsel %vm344, %v332, 0.0
    %346 = vadd.xlane.f32.xlu0 %v345
    %v347 = vpop.xlane.xlu0 %346
    %v348 = vsel %vm344, %v333, 0.0
    %349 = vadd.xlane.f32.xlu0 %v348
    %v350 = vpop.xlane.xlu0 %349
    %v351 = vsel %vm344, %v334, 0.0
    %352 = vadd.xlane.f32.xlu0 %v351
    %v353 = vpop.xlane.xlu0 %352
    %v354 = vsel %vm344, %v335, 0.0
    %355 = vadd.xlane.f32.xlu0 %v354
    %v356 = vpop.xlane.xlu0 %355
    %v357 = vsel %vm344, %v340, 0.0
    %358 = vadd.xlane.f32.xlu0 %v357
    %v359 = vpop.xlane.xlu0 %358
    %v360 = vsel %vm344, %v341, 0.0
    %361 = vadd.xlane.f32.xlu0 %v360
    %v362 = vpop.xlane.xlu0 %361
    %v363 = vsel %vm344, %v342, 0.0
    %364 = vadd.xlane.f32.xlu0 %v363
    %v365 = vpop.xlane.xlu0 %364
    %v366 = vsel %vm344, %v343, 0.0
    %367 = vadd.xlane.f32.xlu0 %v366
    %v368 = vpop.xlane.xlu0 %367
    %v369 = vadd.f32 %v347, %v353
    %v370 = vadd.f32 %v350, %v356
    %v371 = vadd.f32 %v359, %v365
    %v372 = vadd.f32 %v362, %v368
    %v373 = vmul.f32 %v369, 0.03125
    %v374 = vmul.f32 %v370, 0.03125
    %v375 = vmul.f32 %v371, 0.03125
    %v376 = vmul.f32 %v372, 0.03125
    %v377 = vmul.f32 %v373, %v373
    %v378 = vmul.f32 %v374, %v374
    %v379 = vsub.f32 %v375, %v377
    %v380 = vsub.f32 %v376, %v378
    %v381 = vmax.f32 %v379, 0.0
    %v382 = vmax.f32 %v380, 0.0
    %v383 = vadd.f32 %v381, 1e-05
    %v384 = vadd.f32 %v382, 1e-05
    %v385 = vrsqrt.pop %v383
    %v386 = vrsqrt.pop %v384
    %v387 = vmul.f32 %v336, %v385
    %v388 = vmul.f32 %v337, %v386
    %v389 = vmul.f32 %v373, %v387
    %v390 = vmul.f32 %v374, %v388
    %v391 = vsub.f32 %v338, %v389
    %v392 = vsub.f32 %v339, %v390
    %394 = vset.pattern.permute.xlu0 0
    %395 = vperm.xlu0 %394, %v387
    %v396 = vpop.permute.xlu0 %395
    %399 = vset.pattern.permute.xlu0 0
    %400 = vperm.xlu0 %399, %v388
    %v401 = vpop.permute.xlu0 %400
    %v403 = vmul.f32 %v332, %v396
    %v404 = vmul.f32 %v333, %v401
    %v405 = vmul.f32 %v334, %v396
    %v406 = vmul.f32 %v335, %v401
    %408 = vset.pattern.permute.xlu0 0
    %409 = vperm.xlu0 %408, %v391
    %v410 = vpop.permute.xlu0 %409
    %413 = vset.pattern.permute.xlu0 0
    %414 = vperm.xlu0 %413, %v392
    %v415 = vpop.permute.xlu0 %414
    %v417 = vadd.f32 %v403, %v410
    %v418 = vadd.f32 %v404, %v415
    %v419 = vadd.f32 %v405, %v410
    %v420 = vadd.f32 %v406, %v415
    %v421 = vld [vmem:[#allocation13] sm:$0xff]
    %v422 = vld [vmem:[#allocation13 + $0x8] sm:$0xff]
    %v423 = vld [vmem:[#allocation13 + $0x10] sm:$0xff]
    %v424 = vld [vmem:[#allocation13 + $0x18] sm:$0xff]
    %v425 = vld [vmem:[#allocation14] sm:$0xff]
    %v426 = vld [vmem:[#allocation14 + $0x8] sm:$0xff]
    %v427 = vld [vmem:[#allocation14 + $0x10] sm:$0xff]
    %v428 = vld [vmem:[#allocation14 + $0x18] sm:$0xff]
    %430 = vset.pattern.permute.xlu0 0
    %431 = vperm.xlu0 %430, %v425
    %v432 = vpop.permute.xlu0 %431
    %435 = vset.pattern.permute.xlu0 0
    %436 = vperm.xlu0 %435, %v426
    %v437 = vpop.permute.xlu0 %436
    %440 = vset.pattern.permute.xlu0 0
    %441 = vperm.xlu0 %440, %v427
    %v442 = vpop.permute.xlu0 %441
    %445 = vset.pattern.permute.xlu0 0
    %446 = vperm.xlu0 %445, %v428
    %v447 = vpop.permute.xlu0 %446
    %v450 = vsel %vm344, %v421, 0
    %v453 = vsel %vm344, %v422, 0
    %v456 = vsel %vm344, %v423, 0
    %v459 = vsel %vm344, %v424, 0
    %461 = vmatprep.subr.mxu0 0.0
    %462 = vmatpush1.msra.mxu0 %v417
    %463 = vmatprep.subr.mxu0 0.0
    %464 = vmatpush1.msra.mxu0 %v418
    %465 = vmatprep.subr.mxu0 0.0
    %466 = vmatpush1.msra.mxu0 0.0
    %467 = vmatprep.subr.mxu0 0.0
    %468 = vmatpush1.msra.mxu0 0.0
    %469 = vmatprep.subr.mxu0 0.0
    %470 = vmatpush1.msra.mxu0 0.0
    %471 = vmatprep.subr.mxu0 0.0
    %472 = vmatpush1.msra.mxu0 0.0
    %473 = vmatprep.subr.mxu0 0.0
    %474 = vmatpush1.msra.mxu0 0.0
    %475 = vmatprep.subr.mxu0 0.0
    %476 = vmatpush1.msra.mxu0 0.0
    %477 = vmatprep.subr.mxu0 0.0
    %478 = vmatpush1.msra.mxu0 0.0
    %479 = vmatprep.subr.mxu0 0.0
    %480 = vmatpush1.msra.mxu0 0.0
    %481 = vmatprep.subr.mxu0 0.0
    %482 = vmatpush1.msra.mxu0 0.0
    %483 = vmatprep.subr.mxu0 0.0
    %484 = vmatpush1.msra.mxu0 0.0
    %485 = vmatprep.subr.mxu0 0.0
    %486 = vmatpush1.msra.mxu0 0.0
    %487 = vmatprep.subr.mxu0 0.0
    %488 = vmatpush1.msra.mxu0 0.0
    %489 = vmatprep.subr.mxu0 0.0
    %490 = vmatpush1.msra.mxu0 0.0
    %491 = vmatprep.subr.mxu0 0.0
    %492 = vmatpush1.msra.mxu0 0.0
    %493 = vmatprep.subr.mxu0 0.0
    %494 = vmatpush1.msra.mxu0 0.0
    %495 = vmatprep.subr.mxu0 0.0
    %496 = vmatpush1.msra.mxu0 0.0
    %497 = vmatprep.subr.mxu0 0.0
    %498 = vmatpush1.msra.mxu0 0.0
    %499 = vmatprep.subr.mxu0 0.0
    %500 = vmatpush1.msra.mxu0 0.0
    %501 = vmatprep.subr.mxu0 0.0
    %502 = vmatpush1.msra.mxu0 0.0
    %503 = vmatprep.subr.mxu0 0.0
    %504 = vmatpush1.msra.mxu0 0.0
    %505 = vmatprep.subr.mxu0 0.0
    %506 = vmatpush1.msra.mxu0 0.0
    %507 = vmatprep.subr.mxu0 0.0
    %508 = vmatpush1.msra.mxu0 0.0
    %509 = vmatprep.subr.mxu0 0.0
    %510 = vmatpush1.msra.mxu0 0.0
    %511 = vmatprep.subr.mxu0 0.0
    %512 = vmatpush1.msra.mxu0 0.0
    %513 = vmatprep.subr.mxu0 0.0
    %514 = vmatpush1.msra.mxu0 0.0
    %515 = vmatprep.subr.mxu0 0.0
    %516 = vmatpush1.msra.mxu0 0.0
    %517 = vmatprep.subr.mxu0 0.0
    %518 = vmatpush1.msra.mxu0 0.0
    %519 = vmatprep.subr.mxu0 0.0
    %520 = vmatpush1.msra.mxu0 0.0
    %521 = vmatprep.subr.mxu0 0.0
    %522 = vmatpush1.msra.mxu0 0.0
    %523 = vmatprep.subr.mxu0 0.0
    %524 = vmatpush1.msra.mxu0 0.0
    %525 = vmatprep.mubr.f32.mxu0 0.0
    %526 = vmatmul.mubr.f32.gmra.mrb[0].mxu0 %v450
    %v527 = vpop.f32.mrb[0].mxu0
    %v528 = vadd.f32 %v432, %v527
    %v529 = vpop.f32.mrb[0].mxu0
    %530 = vmatprep.mubr.f32.mxu0 0.0
    %531 = vmatmul.mubr.f32.gmra.mrb[0].mxu0 %v453
    %v532 = vpop.f32.mrb[0].mxu0
    %v533 = vadd.f32 %v437, %v532
    %v534 = vpop.f32.mrb[0].mxu0
    %535 = vmatprep.mubr.f32.mxu0 0.0
    %536 = vmatmul.mubr.f32.gmra.mrb[0].mxu0 %v456
    %v537 = vpop.f32.mrb[0].mxu0
    %v538 = vadd.f32 %v442, %v537
    %v539 = vpop.f32.mrb[0].mxu0
    %540 = vmatprep.mubr.f32.mxu0 0.0
    %541 = vmatmul.mubr.f32.gmra.mrb[0].mxu0 %v459
    %v542 = vpop.f32.mrb[0].mxu0
    %v543 = vadd.f32 %v447, %v542
    %v544 = vpop.f32.mrb[0].mxu0
    %545 = vdwg.mxu0
    %546 = vmatprep.subr.mxu0 0.0
    %547 = vmatpush1.msra.mxu0 %v419
    %548 = vmatprep.subr.mxu0 0.0
    %549 = vmatpush1.msra.mxu0 %v420
    %550 = vmatprep.subr.mxu0 0.0
    %551 = vmatpush1.msra.mxu0 0.0
    %552 = vmatprep.subr.mxu0 0.0
    %553 = vmatpush1.msra.mxu0 0.0
    %554 = vmatprep.subr.mxu0 0.0
    %555 = vmatpush1.msra.mxu0 0.0
    %556 = vmatprep.subr.mxu0 0.0
    %557 = vmatpush1.msra.mxu0 0.0
    %558 = vmatprep.subr.mxu0 0.0
    %559 = vmatpush1.msra.mxu0 0.0
    %560 = vmatprep.subr.mxu0 0.0
    %561 = vmatpush1.msra.mxu0 0.0
    %562 = vmatprep.subr.mxu0 0.0
    %563 = vmatpush1.msra.mxu0 0.0
    %564 = vmatprep.subr.mxu0 0.0
    %565 = vmatpush1.msra.mxu0 0.0
    %566 = vmatprep.subr.mxu0 0.0
    %567 = vmatpush1.msra.mxu0 0.0
    %568 = vmatprep.subr.mxu0 0.0
    %569 = vmatpush1.msra.mxu0 0.0
    %570 = vmatprep.subr.mxu0 0.0
    %571 = vmatpush1.msra.mxu0 0.0
    %572 = vmatprep.subr.mxu0 0.0
    %573 = vmatpush1.msra.mxu0 0.0
    %574 = vmatprep.subr.mxu0 0.0
    %575 = vmatpush1.msra.mxu0 0.0
    %576 = vmatprep.subr.mxu0 0.0
    %577 = vmatpush1.msra.mxu0 0.0
    %578 = vmatprep.subr.mxu0 0.0
    %579 = vmatpush1.msra.mxu0 0.0
    %580 = vmatprep.subr.mxu0 0.0
    %581 = vmatpush1.msra.mxu0 0.0
    %582 = vmatprep.subr.mxu0 0.0
    %583 = vmatpush1.msra.mxu0 0.0
    %584 = vmatprep.subr.mxu0 0.0
    %585 = vmatpush1.msra.mxu0 0.0
    %586 = vmatprep.subr.mxu0 0.0
    %587 = vmatpush1.msra.mxu0 0.0
    %588 = vmatprep.subr.mxu0 0.0
    %589 = vmatpush1.msra.mxu0 0.0
    %590 = vmatprep.subr.mxu0 0.0
    %591 = vmatpush1.msra.mxu0 0.0
    %592 = vmatprep.subr.mxu0 0.0
    %593 = vmatpush1.msra.mxu0 0.0
    %594 = vmatprep.subr.mxu0 0.0
    %595 = vmatpush1.msra.mxu0 0.0
    %596 = vmatprep.subr.mxu0 0.0
    %597 = vmatpush1.msra.mxu0 0.0
    %598 = vmatprep.subr.mxu0 0.0
    %599 = vmatpush1.msra.mxu0 0.0
    %600 = vmatprep.subr.mxu0 0.0
    %601 = vmatpush1.msra.mxu0 0.0
    %602 = vmatprep.subr.mxu0 0.0
    %603 = vmatpush1.msra.mxu0 0.0
    %604 = vmatprep.subr.mxu0 0.0
    %605 = vmatpush1.msra.mxu0 0.0
    %606 = vmatprep.subr.mxu0 0.0
    %607 = vmatpush1.msra.mxu0 0.0
    %608 = vmatprep.subr.mxu0 0.0
    %609 = vmatpush1.msra.mxu0 0.0
    %610 = vmatprep.mubr.f32.mxu0 0.0
    %611 = vmatmul.mubr.f32.gmra.mrb[0].mxu0 %v450
    %v612 = vpop.f32.mrb[0].mxu0
    %v613 = vadd.f32 %v432, %v612
    %v614 = vpop.f32.mrb[0].mxu0
    %615 = vmatprep.mubr.f32.mxu0 0.0
    %616 = vmatmul.mubr.f32.gmra.mrb[0].mxu0 %v453
    %v617 = vpop.f32.mrb[0].mxu0
    %v618 = vadd.f32 %v437, %v617
    %v619 = vpop.f32.mrb[0].mxu0
    %620 = vmatprep.mubr.f32.mxu0 0.0
    %621 = vmatmul.mubr.f32.gmra.mrb[0].mxu0 %v456
    %v622 = vpop.f32.mrb[0].mxu0
    %v623 = vadd.f32 %v442, %v622
    %v624 = vpop.f32.mrb[0].mxu0
    %625 = vmatprep.mubr.f32.mxu0 0.0
    %626 = vmatmul.mubr.f32.gmra.mrb[0].mxu0 %v459
    %v627 = vpop.f32.mrb[0].mxu0
    %v628 = vadd.f32 %v447, %v627
    %v629 = vpop.f32.mrb[0].mxu0
    %630 = vdwg.mxu0
    %v631 = vld [vmem:[#allocation16] sm:$0xff]
    %v632 = vld [vmem:[#allocation16 + $0x8] sm:$0xff]
    %v633 = vld [vmem:[#allocation16 + $0x10] sm:$0xff]
    %v634 = vld [vmem:[#allocation16 + $0x18] sm:$0xff]
    %v635 = vld [vmem:[#allocation17] sm:$0xff]
    %v636 = vld [vmem:[#allocation17 + $0x8] sm:$0xff]
    %v637 = vld [vmem:[#allocation17 + $0x10] sm:$0xff]
    %v638 = vld [vmem:[#allocation17 + $0x18] sm:$0xff]
    %v639 = vmul.f32 %v528, %v528
    %v640 = vmul.f32 %v533, %v533
    %v641 = vmul.f32 %v538, %v538
    %v642 = vmul.f32 %v543, %v543
    %v643 = vmul.f32 %v613, %v613
    %v644 = vmul.f32 %v618, %v618
    %v645 = vmul.f32 %v623, %v623
    %v646 = vmul.f32 %v628, %v628
    %v647 = vsel %vm344, %v528, 0.0
    %648 = vadd.xlane.f32.xlu0 %v647
    %v649 = vpop.xlane.xlu0 %648
    %v650 = vsel %vm344, %v533, 0.0
    %651 = vadd.xlane.f32.xlu0 %v650
    %v652 = vpop.xlane.xlu0 %651
    %v653 = vsel %vm344, %v538, 0.0
    %654 = vadd.xlane.f32.xlu0 %v653
    %v655 = vpop.xlane.xlu0 %654
    %v656 = vsel %vm344, %v543, 0.0
    %657 = vadd.xlane.f32.xlu0 %v656
    %v658 = vpop.xlane.xlu0 %657
    %v659 = vsel %vm344, %v613, 0.0
    %660 = vadd.xlane.f32.xlu0 %v659
    %v661 = vpop.xlane.xlu0 %660
    %v662 = vsel %vm344, %v618, 0.0
    %663 = vadd.xlane.f32.xlu0 %v662
    %v664 = vpop.xlane.xlu0 %663
    %v665 = vsel %vm344, %v623, 0.0
    %666 = vadd.xlane.f32.xlu0 %v665
    %v667 = vpop.xlane.xlu0 %666
    %v668 = vsel %vm344, %v628, 0.0
    %669 = vadd.xlane.f32.xlu0 %v668
    %v670 = vpop.xlane.xlu0 %669
    %v671 = vsel %vm344, %v639, 0.0
    %672 = vadd.xlane.f32.xlu0 %v671
    %v673 = vpop.xlane.xlu0 %672
    %v674 = vsel %vm344, %v640, 0.0
    %675 = vadd.xlane.f32.xlu0 %v674
    %v676 = vpop.xlane.xlu0 %675
    %v677 = vsel %vm344, %v641, 0.0
    %678 = vadd.xlane.f32.xlu0 %v677
    %v679 = vpop.xlane.xlu0 %678
    %v680 = vsel %vm344, %v642, 0.0
    %681 = vadd.xlane.f32.xlu0 %v680
    %v682 = vpop.xlane.xlu0 %681
    %v683 = vsel %vm344, %v643, 0.0
    %684 = vadd.xlane.f32.xlu0 %v683
    %v685 = vpop.xlane.xlu0 %684
    %v686 = vsel %vm344, %v644, 0.0
    %687 = vadd.xlane.f32.xlu0 %v686
    %v688 = vpop.xlane.xlu0 %687
    %v689 = vsel %vm344, %v645, 0.0
    %690 = vadd.xlane.f32.xlu0 %v689
    %v691 = vpop.xlane.xlu0 %690
    %v692 = vsel %vm344, %v646, 0.0
    %693 = vadd.xlane.f32.xlu0 %v692
    %v694 = vpop.xlane.xlu0 %693
    %v695 = vadd.f32 %v649, %v661
    %v696 = vadd.f32 %v652, %v664
    %v697 = vadd.f32 %v655, %v667
    %v698 = vadd.f32 %v658, %v670
    %v699 = vadd.f32 %v673, %v685
    %v700 = vadd.f32 %v676, %v688
    %v701 = vadd.f32 %v679, %v691
    %v702 = vadd.f32 %v682, %v694
    %v703 = vmul.f32 %v695, 0.03125
    %v704 = vmul.f32 %v696, 0.03125
    %v705 = vmul.f32 %v697, 0.03125
    %v706 = vmul.f32 %v698, 0.03125
    %v707 = vmul.f32 %v699, 0.03125
    %v708 = vmul.f32 %v700, 0.03125
    %v709 = vmul.f32 %v701, 0.03125
    %v710 = vmul.f32 %v702, 0.03125
    %v711 = vmul.f32 %v703, %v703
    %v712 = vmul.f32 %v704, %v704
    %v713 = vmul.f32 %v705, %v705
    %v714 = vmul.f32 %v706, %v706
    %v715 = vsub.f32 %v707, %v711
    %v716 = vsub.f32 %v708, %v712
    %v717 = vsub.f32 %v709, %v713
    %v718 = vsub.f32 %v710, %v714
    %v719 = vmax.f32 %v715, 0.0
    %v720 = vmax.f32 %v716, 0.0
    %v721 = vmax.f32 %v717, 0.0
    %v722 = vmax.f32 %v718, 0.0
    %v723 = vadd.f32 %v719, 1e-05
    %v724 = vadd.f32 %v720, 1e-05
    %v725 = vadd.f32 %v721, 1e-05
    %v726 = vadd.f32 %v722, 1e-05
    %v727 = vrsqrt.pop %v723
    %v728 = vrsqrt.pop %v724
    %v729 = vrsqrt.pop %v725
    %v730 = vrsqrt.pop %v726
    %v731 = vmul.f32 %v631, %v727
    %v732 = vmul.f32 %v632, %v728
    %v733 = vmul.f32 %v633, %v729
    %v734 = vmul.f32 %v634, %v730
    %v735 = vmul.f32 %v703, %v731
    %v736 = vmul.f32 %v704, %v732
    %v737 = vmul.f32 %v705, %v733
    %v738 = vmul.f32 %v706, %v734
    %v739 = vsub.f32 %v635, %v735
    %v740 = vsub.f32 %v636, %v736
    %v741 = vsub.f32 %v637, %v737
    %v742 = vsub.f32 %v638, %v738
    %744 = vset.pattern.permute.xlu0 0
    %745 = vperm.xlu0 %744, %v731
    %v746 = vpop.permute.xlu0 %745
    %749 = vset.pattern.permute.xlu0 0
    %750 = vperm.xlu0 %749, %v732
    %v751 = vpop.permute.xlu0 %750
    %754 = vset.pattern.permute.xlu0 0
    %755 = vperm.xlu0 %754, %v733
    %v756 = vpop.permute.xlu0 %755
    %759 = vset.pattern.permute.xlu0 0
    %760 = vperm.xlu0 %759, %v734
    %v761 = vpop.permute.xlu0 %760
    %v763 = vmul.f32 %v528, %v746
    %v764 = vmul.f32 %v533, %v751
    %v765 = vmul.f32 %v538, %v756
    %v766 = vmul.f32 %v543, %v761
    %v767 = vmul.f32 %v613, %v746
    %v768 = vmul.f32 %v618, %v751
    %v769 = vmul.f32 %v623, %v756
    %v770 = vmul.f32 %v628, %v761
    %772 = vset.pattern.permute.xlu0 0
    %773 = vperm.xlu0 %772, %v739
    %v774 = vpop.permute.xlu0 %773
    %777 = vset.pattern.permute.xlu0 0
    %778 = vperm.xlu0 %777, %v740
    %v779 = vpop.permute.xlu0 %778
    %782 = vset.pattern.permute.xlu0 0
    %783 = vperm.xlu0 %782, %v741
    %v784 = vpop.permute.xlu0 %783
    %787 = vset.pattern.permute.xlu0 0
    %788 = vperm.xlu0 %787, %v742
    %v789 = vpop.permute.xlu0 %788
    %v791 = vadd.f32 %v763, %v774
    %v792 = vadd.f32 %v764, %v779
    %v793 = vadd.f32 %v765, %v784
    %v794 = vadd.f32 %v766, %v789
    %v795 = vadd.f32 %v767, %v774
    %v796 = vadd.f32 %v768, %v779
    %v797 = vadd.f32 %v769, %v784
    %v798 = vadd.f32 %v770, %v789
    %v799 = vsel %vm344, %v791, -inf
    %800 = vmax.xlane.f32.xlu0 %v799
    %v801 = vpop.xlane.xlu0 %800
    %v802 = vsel %vm344, %v792, -inf
    %803 = vmax.xlane.f32.xlu0 %v802
    %v804 = vpop.xlane.xlu0 %803
    %v805 = vsel %vm344, %v793, -inf
    %806 = vmax.xlane.f32.xlu0 %v805
    %v807 = vpop.xlane.xlu0 %806
    %v808 = vsel %vm344, %v794, -inf
    %809 = vmax.xlane.f32.xlu0 %v808
    %v810 = vpop.xlane.xlu0 %809
    %v811 = vsel %vm344, %v795, -inf
    %812 = vmax.xlane.f32.xlu0 %v811
    %v813 = vpop.xlane.xlu0 %812
    %v814 = vsel %vm344, %v796, -inf
    %815 = vmax.xlane.f32.xlu0 %v814
    %v816 = vpop.xlane.xlu0 %815
    %v817 = vsel %vm344, %v797, -inf
    %818 = vmax.xlane.f32.xlu0 %v817
    %v819 = vpop.xlane.xlu0 %818
    %v820 = vsel %vm344, %v798, -inf
    %821 = vmax.xlane.f32.xlu0 %v820
    %v822 = vpop.xlane.xlu0 %821
    %v823 = vld [vmem:[#allocation19] sm:$0xff]
    %v824 = vld [vmem:[#allocation19 + $0x8] sm:$0xff]
    %v825 = vld [vmem:[#allocation19 + $0x10] sm:$0xff]
    %v826 = vld [vmem:[#allocation19 + $0x18] sm:$0xff]
    %v827 = vld [vmem:[#allocation20] sm:$0x1]
    %v829 = vlaneseq
    %v830 = vshrl.u32 %v829, 7
    %v831 = vsub.s32 0, %v830
    %v832 = vrot.slane %v827, %v831
    %v842 = vlaneseq
    %v843 = vand.u32 %v842, 127
    %v844 = vlaneseq
    %v845 = vshrl.u32 %v844, 7
    %v846 = vsub.s32 %v843, %v845
    %v847 = vrot.slane %v801, %v846
    %v848 = vadd.s32 %v843, 4294967288
    %v849 = vlaneseq
    %v850 = vshrl.u32 %v849, 7
    %v851 = vsub.s32 %v848, %v850
    %v852 = vrot.slane %v804, %v851
    %vm853 = vcmask 130112
    %v854 = vsel %vm853, %v852, %v847
    %v855 = vadd.s32 %v843, 4294967280
    %v856 = vlaneseq
    %v857 = vshrl.u32 %v856, 7
    %v858 = vsub.s32 %v855, %v857
    %v859 = vrot.slane %v807, %v858
    %vm860 = vcmask 195712
    %v861 = vsel %vm860, %v859, %v854
    %v862 = vadd.s32 %v843, 4294967272
    %v863 = vlaneseq
    %v864 = vshrl.u32 %v863, 7
    %v865 = vsub.s32 %v862, %v864
    %v866 = vrot.slane %v810, %v865
    %vm867 = vcmask 261312
    %v868 = vsel %vm867, %v866, %v861
    %v869 = vlaneseq
    %v870 = vshrl.u32 %v869, 7
    %v871 = vsub.s32 %v843, %v870
    %v872 = vrot.slane %v813, %v871
    %v873 = vlaneseq
    %v874 = vshrl.u32 %v873, 7
    %v875 = vsub.s32 %v848, %v874
    %v876 = vrot.slane %v816, %v875
    %v877 = vsel %vm853, %v876, %v872
    %v878 = vlaneseq
    %v879 = vshrl.u32 %v878, 7
    %v880 = vsub.s32 %v855, %v879
    %v881 = vrot.slane %v819, %v880
    %v882 = vsel %vm860, %v881, %v877
    %v883 = vlaneseq
    %v884 = vshrl.u32 %v883, 7
    %v885 = vsub.s32 %v862, %v884
    %v886 = vrot.slane %v822, %v885
    %v887 = vsel %vm867, %v886, %v882
    %vm888 = vcmask 1041409
    %v889 = vsel %vm888, %v887, %v868
    %vm890 = vcmask 261120
    %v891 = vsel %vm890, %v889, 0
    %893 = vmatprep.subr.mxu0 0.0
    %894 = vmatpush1.msra.mxu0 %v823
    %895 = vmatprep.subr.mxu0 0.0
    %896 = vmatpush1.msra.mxu0 %v824
    %897 = vmatprep.subr.mxu0 0.0
    %898 = vmatpush1.msra.mxu0 %v825
    %899 = vmatprep.subr.mxu0 0.0
    %900 = vmatpush1.msra.mxu0 %v826
    %901 = vmatprep.subr.mxu0 0.0
    %902 = vmatpush1.msra.mxu0 0.0
    %903 = vmatprep.subr.mxu0 0.0
    %904 = vmatpush1.msra.mxu0 0.0
    %905 = vmatprep.subr.mxu0 0.0
    %906 = vmatpush1.msra.mxu0 0.0
    %907 = vmatprep.subr.mxu0 0.0
    %908 = vmatpush1.msra.mxu0 0.0
    %909 = vmatprep.subr.mxu0 0.0
    %910 = vmatpush1.msra.mxu0 0.0
    %911 = vmatprep.subr.mxu0 0.0
    %912 = vmatpush1.msra.mxu0 0.0
    %913 = vmatprep.subr.mxu0 0.0
    %914 = vmatpush1.msra.mxu0 0.0
    %915 = vmatprep.subr.mxu0 0.0
    %916 = vmatpush1.msra.mxu0 0.0
    %917 = vmatprep.subr.mxu0 0.0
    %918 = vmatpush1.msra.mxu0 0.0
    %919 = vmatprep.subr.mxu0 0.0
    %920 = vmatpush1.msra.mxu0 0.0
    %921 = vmatprep.subr.mxu0 0.0
    %922 = vmatpush1.msra.mxu0 0.0
    %923 = vmatprep.subr.mxu0 0.0
    %924 = vmatpush1.msra.mxu0 0.0
    %925 = vmatprep.subr.mxu0 0.0
    %926 = vmatpush1.msra.mxu0 0.0
    %927 = vmatprep.subr.mxu0 0.0
    %928 = vmatpush1.msra.mxu0 0.0
    %929 = vmatprep.subr.mxu0 0.0
    %930 = vmatpush1.msra.mxu0 0.0
    %931 = vmatprep.subr.mxu0 0.0
    %932 = vmatpush1.msra.mxu0 0.0
    %933 = vmatprep.subr.mxu0 0.0
    %934 = vmatpush1.msra.mxu0 0.0
    %935 = vmatprep.subr.mxu0 0.0
    %936 = vmatpush1.msra.mxu0 0.0
    %937 = vmatprep.subr.mxu0 0.0
    %938 = vmatpush1.msra.mxu0 0.0
    %939 = vmatprep.subr.mxu0 0.0
    %940 = vmatpush1.msra.mxu0 0.0
    %941 = vmatprep.subr.mxu0 0.0
    %942 = vmatpush1.msra.mxu0 0.0
    %943 = vmatprep.subr.mxu0 0.0
    %944 = vmatpush1.msra.mxu0 0.0
    %945 = vmatprep.subr.mxu0 0.0
    %946 = vmatpush1.msra.mxu0 0.0
    %947 = vmatprep.subr.mxu0 0.0
    %948 = vmatpush1.msra.mxu0 0.0
    %949 = vmatprep.subr.mxu0 0.0
    %950 = vmatpush1.msra.mxu0 0.0
    %951 = vmatprep.subr.mxu0 0.0
    %952 = vmatpush1.msra.mxu0 0.0
    %953 = vmatprep.subr.mxu0 0.0
    %954 = vmatpush1.msra.mxu0 0.0
    %955 = vmatprep.subr.mxu0 0.0
    %956 = vmatpush1.msra.mxu0 0.0
    %957 = vmatprep.mubr.f32.mxu0 0.0
    %958 = vmatmul.mubr.f32.gmra.mrb[0].mxu0 %v891
    %v959 = vpop.f32.mrb[0].mxu0
    %v960 = vadd.f32 %v832, %v959
    %v961 = vpop.f32.mrb[0].mxu0
    %962 = vdwg.mxu0
    %v963 = vld [vmem:[#allocation22] sm:$0x1]
    %v964 = vld [vmem:[#allocation23] sm:$0x1]
    %v965 = vmul.f32 %v960, %v960
    %vm966 = vcmask 189440
    %v967 = vsel %vm966, %v960, 0.0
    %v968 = vrot.slane %v967, 4
    %v969 = vadd.f32 %v967, %v968
    %v970 = vrot.slane %v969, 2
    %v971 = vadd.f32 %v969, %v970
    %v972 = vrot.slane %v971, 1
    %v973 = vadd.f32 %v971, %v972
    %v974 = vsel %vm966, %v965, 0.0
    %v975 = vrot.slane %v974, 4
    %v976 = vadd.f32 %v974, %v975
    %v977 = vrot.slane %v976, 2
    %v978 = vadd.f32 %v976, %v977
    %v979 = vrot.slane %v978, 1
    %v980 = vadd.f32 %v978, %v979
    %v981 = vmul.f32 %v973, 0.5
    %v982 = vmul.f32 %v980, 0.5
    %v983 = vmul.f32 %v981, %v981
    %v984 = vsub.f32 %v982, %v983
    %v985 = vmax.f32 %v984, 0.0
    %v986 = vadd.f32 %v985, 1e-05
    %v987 = vrsqrt.pop %v986
    %v988 = vmul.f32 %v963, %v987
    %v989 = vmul.f32 %v981, %v988
    %v990 = vsub.f32 %v964, %v989
    %v992 = vlaneseq
    %v993 = vshrl.u32 %v992, 7
    %v994 = vsub.s32 0, %v993
    %v995 = vrot.slane %v988, %v994
    %v997 = vmul.f32 %v960, %v995
    %v999 = vlaneseq
    %v1000 = vshrl.u32 %v999, 7
    %v1001 = vsub.s32 0, %v1000
    %v1002 = vrot.slane %v990, %v1001
    %v1004 = vadd.f32 %v997, %v1002
    %v1005 = vld [vmem:[#allocation25] sm:$0xff]
    %v1006 = vld [vmem:[#allocation25 + $0x8] sm:$0xff]
    %v1007 = vld [vmem:[#allocation25 + $0x10] sm:$0xff]
    %v1008 = vld [vmem:[#allocation26] sm:$0x1]
    %v1010 = vlaneseq
    %v1011 = vshrl.u32 %v1010, 7
    %v1012 = vsub.s32 0, %v1011
    %v1013 = vrot.slane %v1008, %v1012
    %vm1015 = vcmask 195584
    %v1017 = vsel %vm1015, %v1004, 0
    %1019 = vmatprep.subr.mxu0 0.0
    %1020 = vmatpush1.msra.mxu0 %v1005
    %1021 = vmatprep.subr.mxu0 0.0
    %1022 = vmatpush1.msra.mxu0 %v1006
    %1023 = vmatprep.subr.mxu0 0.0
    %1024 = vmatpush1.msra.mxu0 %v1007
    %1025 = vmatprep.subr.mxu0 0.0
    %1026 = vmatpush1.msra.mxu0 0.0
    %1027 = vmatprep.subr.mxu0 0.0
    %1028 = vmatpush1.msra.mxu0 0.0
    %1029 = vmatprep.subr.mxu0 0.0
    %1030 = vmatpush1.msra.mxu0 0.0
    %1031 = vmatprep.subr.mxu0 0.0
    %1032 = vmatpush1.msra.mxu0 0.0
    %1033 = vmatprep.subr.mxu0 0.0
    %1034 = vmatpush1.msra.mxu0 0.0
    %1035 = vmatprep.subr.mxu0 0.0
    %1036 = vmatpush1.msra.mxu0 0.0
    %1037 = vmatprep.subr.mxu0 0.0
    %1038 = vmatpush1.msra.mxu0 0.0
    %1039 = vmatprep.subr.mxu0 0.0
    %1040 = vmatpush1.msra.mxu0 0.0
    %1041 = vmatprep.subr.mxu0 0.0
    %1042 = vmatpush1.msra.mxu0 0.0
    %1043 = vmatprep.subr.mxu0 0.0
    %1044 = vmatpush1.msra.mxu0 0.0
    %1045 = vmatprep.subr.mxu0 0.0
    %1046 = vmatpush1.msra.mxu0 0.0
    %1047 = vmatprep.subr.mxu0 0.0
    %1048 = vmatpush1.msra.mxu0 0.0
    %1049 = vmatprep.subr.mxu0 0.0
    %1050 = vmatpush1.msra.mxu0 0.0
    %1051 = vmatprep.subr.mxu0 0.0
    %1052 = vmatpush1.msra.mxu0 0.0
    %1053 = vmatprep.subr.mxu0 0.0
    %1054 = vmatpush1.msra.mxu0 0.0
    %1055 = vmatprep.subr.mxu0 0.0
    %1056 = vmatpush1.msra.mxu0 0.0
    %1057 = vmatprep.subr.mxu0 0.0
    %1058 = vmatpush1.msra.mxu0 0.0
    %1059 = vmatprep.subr.mxu0 0.0
    %1060 = vmatpush1.msra.mxu0 0.0
    %1061 = vmatprep.subr.mxu0 0.0
    %1062 = vmatpush1.msra.mxu0 0.0
    %1063 = vmatprep.subr.mxu0 0.0
    %1064 = vmatpush1.msra.mxu0 0.0
    %1065 = vmatprep.subr.mxu0 0.0
    %1066 = vmatpush1.msra.mxu0 0.0
    %1067 = vmatprep.subr.mxu0 0.0
    %1068 = vmatpush1.msra.mxu0 0.0
    %1069 = vmatprep.subr.mxu0 0.0
    %1070 = vmatpush1.msra.mxu0 0.0
    %1071 = vmatprep.subr.mxu0 0.0
    %1072 = vmatpush1.msra.mxu0 0.0
    %1073 = vmatprep.subr.mxu0 0.0
    %1074 = vmatpush1.msra.mxu0 0.0
    %1075 = vmatprep.subr.mxu0 0.0
    %1076 = vmatpush1.msra.mxu0 0.0
    %1077 = vmatprep.subr.mxu0 0.0
    %1078 = vmatpush1.msra.mxu0 0.0
    %1079 = vmatprep.subr.mxu0 0.0
    %1080 = vmatpush1.msra.mxu0 0.0
    %1081 = vmatprep.subr.mxu0 0.0
    %1082 = vmatpush1.msra.mxu0 0.0
    %1083 = vmatprep.mubr.f32.mxu0 0.0
    %1084 = vmatmul.mubr.f32.gmra.mrb[0].mxu0 %v1017
    %v1085 = vpop.f32.mrb[0].mxu0
    %v1086 = vadd.f32 %v1013, %v1085
    %v1087 = vpop.f32.mrb[0].mxu0
    %1088 = vdwg.mxu0
    %vm1089 = vcmp.eq.s32.totalorder %v843, 2
    %v1090 = vmax.f32 %v1086, 0.0
    %v1091 = vmin.f32 %v1090, 6.2831855
    %v1092 = vsel %vm1089, %v1091, %v1086
    %vm1093 = vcmask 25600
    %1094 = vst.msk [vmem:[#allocation29] sm:$0x3] %vm1093, %v1092
    %v1095 = vand.u32 2147483647, %v1092
    %vm1096 = vcmp.le.f32.partialorder %v1095, 0.7853982
    %vm1097 = vcmp.lt.s32.totalorder %v1092, 0
    %v1098 = vand.u32 %v1092, 2139095040
    %v1099 = vshrl.u32 %v1098, 23
    %v1100 = vsub.s32 %v1099, 127
    %v1101 = vand.u32 2147483647, %v1092
    %v1102 = vand.u32 %v1101, 8388607
    %v1103 = vor.u32 %v1102, 8388608
    %v1104 = vsub.s32 0, %v1103
    %v1105 = vadd.s32 %v1100, 1
    %vm1106 = vcmp.gt.s32.totalorder %v1105, 0
    %v1107 = vsel %vm1106, %v1105, 0
    %v1108 = vshrl.u32 %v1107, 5
    %v1109 = vand.u32 %v1107, 31
    %v1110 = vsub.s32 32, %v1109
    %v1111 = vshrl.u32 683565275, %v1110
    %v1112 = vshll.u32 683565275, %v1109
    %v1113 = vshrl.u32 2475754826, %v1110
    %v1114 = vor.u32 %v1112, %v1113
    %v1115 = vshll.u32 2475754826, %v1109
    %v1116 = vshrl.u32 2131351028, %v1110
    %v1117 = vor.u32 %v1115, %v1116
    %v1118 = vshll.u32 2131351028, %v1109
    %v1119 = vshrl.u32 2102212464, %v1110
    %v1120 = vor.u32 %v1118, %v1119
    %v1121 = vshll.u32 2102212464, %v1109
    %v1122 = vshrl.u32 920167782, %v1110
    %v1123 = vor.u32 %v1121, %v1122
    %v1124 = vshll.u32 920167782, %v1109
    %v1125 = vshrl.u32 1326507024, %v1110
    %v1126 = vor.u32 %v1124, %v1125
    %vm1127 = vcmp.lt.s32.totalorder %v1108, 1
    %vm1128 = vcmp.lt.s32.totalorder %v1108, 2
    %vm1129 = vcmp.lt.s32.totalorder %v1108, 3
    %vm1130 = vcmp.lt.s32.totalorder %v1108, 4
    %v1131 = vsel %vm1127, %v1111, %v1114
    %v1132 = vsel %vm1130, %v1120, 2102212464
    %v1133 = vsel %vm1129, %v1117, %v1132
    %v1134 = vsel %vm1128, %v1131, %v1133
    %v1135 = vsel %vm1127, %v1114, %v1117
    %v1136 = vsel %vm1130, %v1123, 920167782
    %v1137 = vsel %vm1129, %v1120, %v1136
    %v1138 = vsel %vm1128, %v1135, %v1137
    %v1139 = vsel %vm1127, %v1117, %v1120
    %v1140 = vsel %vm1130, %v1126, 1326507024
    %v1141 = vsel %vm1129, %v1123, %v1140
    %v1142 = vsel %vm1128, %v1139, %v1141
    %v1143 = vshll.u32 %v1103, 8
    %v1144 = vmul.u32.u64.compose %v1143, %v1142
    %v1145 = vextract.low.u32 %v1144
    %v1146 = vextract.high.u32 %v1144
    %v1147 = vmul.u32.u64.compose %v1143, %v1138
    %v1148 = vextract.low.u32 %v1147
    %v1149 = vextract.high.u32 %v1147
    %v1150 = vmul.u32 %v1143, %v1134
    %v1151 = vadd.s32 %v1146, %v1148
    %vm1152 = vc.u32 %v1146, %v1148
    %v1153 = vadd.s32 %v1149, 1
    %v1154 = vsel %vm1152, %v1153, %v1149
    %v1155 = vadd.s32 %v1150, %v1154
    %v1156 = vadd.s32 %v1155, 536870912
    %v1157 = vshrl.u32 %v1156, 30
    %v1158 = vshll.u32 %v1157, 30
    %v1159 = vsub.s32 %v1155, %v1158
    %vm1160 = vcmp.lt.s32.totalorder %v1159, 0
    %v1161 = vsub.s32 0, %v1159
    %v1162 = vsel %vm1160, %v1161, %v1159
    %v1163 = vclz %v1162
    %v1164 = vsub.s32 %v1163, 2
    %vm1165 = vcmp.gt.s32.totalorder 0, %v1164
    %v1166 = vsel %vm1165, 0, %v1164
    %v1167 = vsub.s32 32, %v1166
    %v1168 = vshll.u32 %v1159, %v1166
    %v1169 = vshrl.u32 %v1151, %v1167
    %v1170 = vor.u32 %v1168, %v1169
    %v1171 = vsub.s32 4294967266, %v1166
    %v1172 = vadd.s32 %v1171, 127
    %v1173 = vshll.u32 %v1172, 23
    %v1174 = vor.u32 4788187, %v1173
    %v1175 = vand.u32 2147483647, %v1174
    %v1177 = vcvt.s32.f32 %v1170
    %v1178 = vmul.f32 %v1177, %v1175
    %v1179 = vxor.u32 %v1178, 2147483648
    %v1180 = vsel %vm1097, %v1179, %v1178
    %v1181 = vsub.s32 4, %v1157
    %v1182 = vsel %vm1097, %v1181, %v1157
    %v1183 = vsel %vm1096, %v1092, %v1180
    %v1184 = vsel %vm1096, 0, %v1182
    %v1185 = vcosq.f32.pop %v1183
    %v1186 = vsinq.f32.pop %v1183
    %vm1187 = vweird.f32 %v1092
    %v1188 = vand.u32 %v1184, 3
    %vm1189 = vcmp.lt.s32.totalorder %v1188, 2
    %vm1190 = vcmp.eq.s32.totalorder %v1188, 0
    %v1191 = vxor.u32 %v1186, 2147483648
    %v1192 = vsel %vm1190, %v1185, %v1191
    %vm1193 = vcmp.eq.s32.totalorder %v1188, 2
    %v1194 = vxor.u32 %v1185, 2147483648
    %v1195 = vsel %vm1193, %v1194, %v1186
    %v1196 = vsel %vm1189, %v1192, %v1195
    %v1197 = vsel %vm1187, nan, %v1196
    %v1200 = vunpack.c.l.s4 1966171168
    %v1201 = vunpack.c.0.s8 %v1200
    %v1202 = vlaneseq
    %v1203 = vshrl.u32 %v1202, 7
    %v1204 = vsub.s32 %v1201, %v1203
    %v1205 = vrot.slane %v1197, %v1204
    %v1206 = vcombine.high %v1205, %v1205
    %v1208 = vunpack.c.l.s4 1966171168
    %v1209 = vunpack.c.0.s8 %v1208
    %v1210 = vlaneseq
    %v1211 = vshrl.u32 %v1210, 7
    %v1212 = vsub.s32 %v1209, %v1211
    %v1213 = vrot.slane %v1205, %v1212
    %v1215 = vunpack.c.l.s4 1966171168
    %v1216 = vunpack.c.0.s8 %v1215
    %v1217 = vlaneseq
    %v1218 = vshrl.u32 %v1217, 7
    %v1219 = vsub.s32 %v1216, %v1218
    %v1220 = vrot.slane %v1206, %v1219
    %v1221 = vand.u32 2147483647, %v1092
    %vm1222 = vcmp.le.f32.partialorder %v1221, 0.7853982
    %vm1223 = vcmp.lt.s32.totalorder %v1092, 0
    %v1224 = vand.u32 %v1092, 2139095040
    %v1225 = vshrl.u32 %v1224, 23
    %v1226 = vsub.s32 %v1225, 127
    %v1227 = vand.u32 2147483647, %v1092
    %v1228 = vand.u32 %v1227, 8388607
    %v1229 = vor.u32 %v1228, 8388608
    %v1230 = vsub.s32 0, %v1229
    %v1231 = vadd.s32 %v1226, 1
    %vm1232 = vcmp.gt.s32.totalorder %v1231, 0
    %v1233 = vsel %vm1232, %v1231, 0
    %v1234 = vshrl.u32 %v1233, 5
    %v1235 = vand.u32 %v1233, 31
    %v1236 = vsub.s32 32, %v1235
    %v1237 = vshrl.u32 683565275, %v1236
    %v1238 = vshll.u32 683565275, %v1235
    %v1239 = vshrl.u32 2475754826, %v1236
    %v1240 = vor.u32 %v1238, %v1239
    %v1241 = vshll.u32 2475754826, %v1235
    %v1242 = vshrl.u32 2131351028, %v1236
    %v1243 = vor.u32 %v1241, %v1242
    %v1244 = vshll.u32 2131351028, %v1235
    %v1245 = vshrl.u32 2102212464, %v1236
    %v1246 = vor.u32 %v1244, %v1245
    %v1247 = vshll.u32 2102212464, %v1235
    %v1248 = vshrl.u32 920167782, %v1236
    %v1249 = vor.u32 %v1247, %v1248
    %v1250 = vshll.u32 920167782, %v1235
    %v1251 = vshrl.u32 1326507024, %v1236
    %v1252 = vor.u32 %v1250, %v1251
    %vm1253 = vcmp.lt.s32.totalorder %v1234, 1
    %vm1254 = vcmp.lt.s32.totalorder %v1234, 2
    %vm1255 = vcmp.lt.s32.totalorder %v1234, 3
    %vm1256 = vcmp.lt.s32.totalorder %v1234, 4
    %v1257 = vsel %vm1253, %v1237, %v1240
    %v1258 = vsel %vm1256, %v1246, 2102212464
    %v1259 = vsel %vm1255, %v1243, %v1258
    %v1260 = vsel %vm1254, %v1257, %v1259
    %v1261 = vsel %vm1253, %v1240, %v1243
    %v1262 = vsel %vm1256, %v1249, 920167782
    %v1263 = vsel %vm1255, %v1246, %v1262
    %v1264 = vsel %vm1254, %v1261, %v1263
    %v1265 = vsel %vm1253, %v1243, %v1246
    %v1266 = vsel %vm1256, %v1252, 1326507024
    %v1267 = vsel %vm1255, %v1249, %v1266
    %v1268 = vsel %vm1254, %v1265, %v1267
    %v1269 = vshll.u32 %v1229, 8
    %v1270 = vmul.u32.u64.compose %v1269, %v1268
    %v1271 = vextract.low.u32 %v1270
    %v1272 = vextract.high.u32 %v1270
    %v1273 = vmul.u32.u64.compose %v1269, %v1264
    %v1274 = vextract.low.u32 %v1273
    %v1275 = vextract.high.u32 %v1273
    %v1276 = vmul.u32 %v1269, %v1260
    %v1277 = vadd.s32 %v1272, %v1274
    %vm1278 = vc.u32 %v1272, %v1274
    %v1279 = vadd.s32 %v1275, 1
    %v1280 = vsel %vm1278, %v1279, %v1275
    %v1281 = vadd.s32 %v1276, %v1280
    %v1282 = vadd.s32 %v1281, 536870912
    %v1283 = vshrl.u32 %v1282, 30
    %v1284 = vshll.u32 %v1283, 30
    %v1285 = vsub.s32 %v1281, %v1284
    %vm1286 = vcmp.lt.s32.totalorder %v1285, 0
    %v1287 = vsub.s32 0, %v1285
    %v1288 = vsel %vm1286, %v1287, %v1285
    %v1289 = vclz %v1288
    %v1290 = vsub.s32 %v1289, 2
    %vm1291 = vcmp.gt.s32.totalorder 0, %v1290
    %v1292 = vsel %vm1291, 0, %v1290
    %v1293 = vsub.s32 32, %v1292
    %v1294 = vshll.u32 %v1285, %v1292
    %v1295 = vshrl.u32 %v1277, %v1293
    %v1296 = vor.u32 %v1294, %v1295
    %v1297 = vsub.s32 4294967266, %v1292
    %v1298 = vadd.s32 %v1297, 127
    %v1299 = vshll.u32 %v1298, 23
    %v1300 = vor.u32 4788187, %v1299
    %v1301 = vand.u32 2147483647, %v1300
    %v1303 = vcvt.s32.f32 %v1296
    %v1304 = vmul.f32 %v1303, %v1301
    %v1305 = vxor.u32 %v1304, 2147483648
    %v1306 = vsel %vm1223, %v1305, %v1304
    %v1307 = vsub.s32 4, %v1283
    %v1308 = vsel %vm1223, %v1307, %v1283
    %v1309 = vsel %vm1222, %v1092, %v1306
    %v1310 = vsel %vm1222, 0, %v1308
    %v1311 = vcosq.f32.pop %v1309
    %v1312 = vsinq.f32.pop %v1309
    %vm1313 = vweird.f32 %v1092
    %v1314 = vadd.s32 %v1310, 3
    %v1315 = vand.u32 %v1314, 3
    %vm1316 = vcmp.lt.s32.totalorder %v1315, 2
    %vm1317 = vcmp.eq.s32.totalorder %v1315, 0
    %v1318 = vxor.u32 %v1312, 2147483648
    %v1319 = vsel %vm1317, %v1311, %v1318
    %vm1320 = vcmp.eq.s32.totalorder %v1315, 2
    %v1321 = vxor.u32 %v1311, 2147483648
    %v1322 = vsel %vm1320, %v1321, %v1312
    %v1323 = vsel %vm1316, %v1319, %v1322
    %v1324 = vsel %vm1313, nan, %v1323
    %v1327 = vunpack.c.l.s4 1966171168
    %v1328 = vunpack.c.0.s8 %v1327
    %v1329 = vlaneseq
    %v1330 = vshrl.u32 %v1329, 7
    %v1331 = vsub.s32 %v1328, %v1330
    %v1332 = vrot.slane %v1324, %v1331
    %v1333 = vcombine.high %v1332, %v1332
    %v1335 = vunpack.c.l.s4 1966171168
    %v1336 = vunpack.c.0.s8 %v1335
    %v1337 = vlaneseq
    %v1338 = vshrl.u32 %v1337, 7
    %v1339 = vsub.s32 %v1336, %v1338
    %v1340 = vrot.slane %v1332, %v1339
    %v1342 = vunpack.c.l.s4 1966171168
    %v1343 = vunpack.c.0.s8 %v1342
    %v1344 = vlaneseq
    %v1345 = vshrl.u32 %v1344, 7
    %v1346 = vsub.s32 %v1343, %v1345
    %v1347 = vrot.slane %v1333, %v1346
    %v1350 = vunpack.c.l.s4 1966171168
    %v1351 = vunpack.c.0.s8 %v1350
    %v1352 = vlaneseq
    %v1353 = vshrl.u32 %v1352, 7
    %v1354 = vsub.s32 %v1351, %v1353
    %v1355 = vrot.slane %v1092, %v1354
    %v1356 = vcombine.high %v1355, %v1355
    %v1358 = vunpack.c.l.s4 1966171168
    %v1359 = vunpack.c.0.s8 %v1358
    %v1360 = vlaneseq
    %v1361 = vshrl.u32 %v1360, 7
    %v1362 = vsub.s32 %v1359, %v1361
    %v1363 = vrot.slane %v1355, %v1362
    %v1365 = vunpack.c.l.s4 1966171168
    %v1366 = vunpack.c.0.s8 %v1365
    %v1367 = vlaneseq
    %v1368 = vshrl.u32 %v1367, 7
    %v1369 = vsub.s32 %v1366, %v1368
    %v1370 = vrot.slane %v1356, %v1369
    %1371 = vset.pattern.permute.xlu0 2
    %1372 = vperm.xlu0 %1371, %v1213
    %v1373 = vpop.permute.xlu0 %1372
    %v1375 = vlaneseq
    %v1376 = vshrl.u32 %v1375, 7
    %v1377 = vsub.s32 0, %v1376
    %v1378 = vrot.slane %v1373, %v1377
    %1379 = vset.pattern.permute.xlu0 2
    %1380 = vperm.xlu0 %1379, %v1220
    %v1381 = vpop.permute.xlu0 %1380
    %v1383 = vlaneseq
    %v1384 = vshrl.u32 %v1383, 7
    %v1385 = vsub.s32 0, %v1384
    %v1386 = vrot.slane %v1381, %v1385
    %v1387 = vmul.f32 %v1378, %v266
    %v1388 = vmul.f32 %v1386, %v267
    %1389 = vset.pattern.permute.xlu0 2
    %1390 = vperm.xlu0 %1389, %v1340
    %v1391 = vpop.permute.xlu0 %1390
    %v1393 = vlaneseq
    %v1394 = vshrl.u32 %v1393, 7
    %v1395 = vsub.s32 0, %v1394
    %v1396 = vrot.slane %v1391, %v1395
    %1397 = vset.pattern.permute.xlu0 2
    %1398 = vperm.xlu0 %1397, %v1347
    %v1399 = vpop.permute.xlu0 %1398
    %v1401 = vlaneseq
    %v1402 = vshrl.u32 %v1401, 7
    %v1403 = vsub.s32 0, %v1402
    %v1404 = vrot.slane %v1399, %v1403
    %v1405 = vmul.f32 %v1396, %v266
    %v1406 = vmul.f32 %v1404, %v267
    %v1409 = vrot.slane %v1405, 1
    %v1410 = vrot.slane %v1406, 1
    %v1413 = vsub.f32 %v1387, %v1409
    %v1414 = vsub.f32 %v1388, %v1410
    %1415 = vset.pattern.permute.xlu0 0
    %1416 = vperm.xlu0 %1415, %v1363
    %v1417 = vpop.permute.xlu0 %1416
    %v1419 = vlaneseq
    %v1420 = vshrl.u32 %v1419, 7
    %v1421 = vsub.s32 0, %v1420
    %v1422 = vrot.slane %v1417, %v1421
    %1423 = vset.pattern.permute.xlu0 0
    %1424 = vperm.xlu0 %1423, %v1370
    %v1425 = vpop.permute.xlu0 %1424
    %v1427 = vlaneseq
    %v1428 = vshrl.u32 %v1427, 7
    %v1429 = vsub.s32 0, %v1428
    %v1430 = vrot.slane %v1425, %v1429
    %v1431 = vadd.f32 %v1413, %v1422
    %v1432 = vadd.f32 %v1414, %v1430
    %v1435 = vrot.slane %v1387, 1
    %v1436 = vrot.slane %v1388, 1
    %v1439 = vadd.f32 %v1405, %v1435
    %v1440 = vadd.f32 %v1406, %v1436
    %1441 = vset.pattern.permute.xlu0 1
    %1442 = vperm.xlu0 %1441, %v1363
    %v1443 = vpop.permute.xlu0 %1442
    %v1445 = vlaneseq
    %v1446 = vshrl.u32 %v1445, 7
    %v1447 = vsub.s32 0, %v1446
    %v1448 = vrot.slane %v1443, %v1447
    %1449 = vset.pattern.permute.xlu0 1
    %1450 = vperm.xlu0 %1449, %v1370
    %v1451 = vpop.permute.xlu0 %1450
    %v1453 = vlaneseq
    %v1454 = vshrl.u32 %v1453, 7
    %v1455 = vsub.s32 0, %v1454
    %v1456 = vrot.slane %v1451, %v1455
    %v1457 = vadd.f32 %v1439, %v1448
    %v1458 = vadd.f32 %v1440, %v1456
    %v1461 = vrot.slane %v1457, 7
    %v1462 = vrot.slane %v1458, 7
    %vm1465 = vcmask 1040384
    %v1466 = vsel %vm1465, %v1431, %v1461
    %v1467 = vsel %vm1465, %v1432, %v1462
    %vm1468 = vcmask 123904
    %1469 = vst.msk [vmem:[#allocation28] sm:$0x3] %vm1468, %v1466
    %1470 = vst.msk [vmem:[#allocation28 + $0x2] sm:$0x3] %vm1468, %v1467
    // Predicated region
    $region130: #{transform_net.1} parent=1 // pred_check
      _
    $region131: #{transform_net.1} parent=1 // pred_check_branch
      %1472 = sbr.rel (0) target = $region133
    $region132: #{transform_net.1} parent=1 // pred_region
      %s1474 = ssub.s32 64, 64
      %1475 = vsyncadd [#allocation4], %s1474
      %s1476 = sshll.u32 [#allocation28], 4
      %s1477 = int_to_ptr.vmem [resolvable:$true] %s1476
      %1482 = dma.vmem_to_hbm [thread:$0]  %s1477, 64, %s16, [#allocation4], 32, 32, 2
    $region133: #{transform_net.1} parent=1 // pred_fallthru
      _
    // Predicated region
    $region134: #{transform_net.1} parent=1 // pred_check
      _
    $region135: #{transform_net.1} parent=1 // pred_check_branch
      %1484 = sbr.rel (0) target = $region137
    $region136: #{transform_net.1} parent=1 // pred_region
      %s1486 = ssub.s32 32, 32
      %1487 = vsyncadd [#allocation30], %s1486
      %s1489 = sshll.u32 [#allocation29], 4
      %s1490 = int_to_ptr.vmem [resolvable:$true] %s1489
      %1492 = dma.vmem_to_hbm [thread:$0]  %s1490, 32, %s17, [#allocation30]
    $region137: #{transform_net.1} parent=1 // pred_fallthru
      _
    // Predicated region
    $region138: #{transform_net.1} parent=1 // pred_check
      _
    $region139: #{transform_net.1} parent=1 // pred_check_branch
      %1494 = sbr.rel (0) target = $region141
    $region140: #{transform_net.1} parent=1 // pred_region
      %1495 = dma.done [#allocation4], 64
    $region141: #{transform_net.1} parent=1 // pred_fallthru
      _
    // Predicated region
    $region142: #{transform_net.1} parent=1 // pred_check
      _
    $region143: #{transform_net.1} parent=1 // pred_check_branch
      %1497 = sbr.rel (0) target = $region145
    $region144: #{transform_net.1} parent=1 // pred_region
      %1498 = dma.done [#allocation30], 32
    $region145: #{transform_net.1} parent=1 // pred_fallthru
      _
    %1499 = vsyncpa [#allocation3], 1
    %1500 = vsyncpa [#allocation6], 1
    %1501 = vsyncpa [#allocation9], 1
    %1502 = vsyncpa [#allocation12], 1
    %1503 = vsyncpa [#allocation15], 1
    %1504 = vsyncpa [#allocation18], 1
    %1505 = vsyncpa [#allocation21], 1
    %1506 = vsyncpa [#allocation24], 1
    %1507 = vsyncpa [#allocation27], 1
    %1508 = vsyncpa [#allocation4], 1
    %1509 = vsyncpa [#allocation30], 1

</llo_original>
